<compile_context>
chip_gen: v6e
topology: v6e:2x2x1
jax: 0.10.0
libtpu: 0.0.40
codegen_flags: <defaults>
</compile_context>

<pallas_src>
import functools

import jax
import jax.numpy as jnp
from jax.experimental import pallas as pl
from jax.experimental.pallas import tpu as pltpu

LAYER_NORM_EPS = 1e-12


def _bert_output_kernel(x_ref, w_ref, b_ref, res_ref, g_ref, beta_ref, mask_ref,
                        out_ref, acc_ref, *, eps, in_grow_dim):
    k = pl.program_id(1)

    @pl.when(k == 0)
    def _():
        acc_ref[...] = jnp.zeros_like(acc_ref)

    # MXU matmul in the operand dtype (bf16 or fp32), fp32 accumulation.
    acc_ref[...] += jnp.dot(x_ref[...], w_ref[...],
                            preferred_element_type=jnp.float32)

    @pl.when(k == pl.num_programs(1) - 1)
    def _():
        h = acc_ref[...] + b_ref[...].astype(jnp.float32)
        # TODO(synk): nn.Dropout is identity here (inference); training-mode
        # dropout would need pltpu.prng_* with a per-call seed.
        h = h + res_ref[...].astype(jnp.float32)

        # LayerNormEx with all-ones grow_mask_vec and in_growth=False reduces
        # to a standard LayerNorm over the hidden dim.
        mean = jnp.mean(h, axis=-1, keepdims=True)
        xc = h - mean
        var = jnp.mean(xc * xc, axis=-1, keepdims=True)
        h = xc * jax.lax.rsqrt(var + eps) * g_ref[...].astype(jnp.float32) \
            + beta_ref[...].astype(jnp.float32)

        if in_grow_dim:
            # Visible post-LN masking from BertOutputEx.forward.
            h = h * mask_ref[...].astype(jnp.float32)
        # TODO(synk): the in_growth=True masking *inside* LayerNormEx itself is
        # not modeled (its definition is not provided); the default-constructed
        # module never enables it.

        out_ref[...] = h.astype(out_ref.dtype)


def _pick_tile(dim, cap, align):
    """Largest multiple of `align` that divides `dim` and is <= cap, else `dim`."""
    best = dim
    t = align
    while t <= min(dim, cap):
        if dim % t == 0:
            best = t
        t += align
    return best


def bert_output_ex(hidden_states, input_tensor, params, *,
                   eps=LAYER_NORM_EPS, in_grow_dim=False,
                   tm_cap=256, tk_cap=512):
    B, S, I = hidden_states.shape
    Br, Sr, H = input_tensor.shape
    assert (B, S) == (Br, Sr)

    N = B * S
    x = hidden_states.reshape(N, I)
    res = input_tensor.reshape(N, H)

    w = params["dense_w"].T                      # (I, H): (in, out) so kernel does x @ W
    b = params["dense_b"].reshape(1, H)
    g = params["ln_w"].reshape(1, H)
    beta = params["ln_b"].reshape(1, H)
    mask = params["grow_mask_vec"].reshape(1, H)

    tm = _pick_tile(N, tm_cap, 8)                # sublane-aligned row tile
    tk = _pick_tile(I, tk_cap, 128)              # lane-aligned reduction tile
    grid = (N // tm, I // tk)

    out_dtype = hidden_states.dtype
    itemsize = jnp.dtype(out_dtype).itemsize
    cost = pl.CostEstimate(
        flops=2 * N * I * H,
        transcendentals=0,
        bytes_accessed=(N * I + I * H + 2 * N * H) * itemsize,
    )

    kernel = functools.partial(_bert_output_kernel, eps=eps, in_grow_dim=in_grow_dim)

    out = pl.pallas_call(
        kernel,
        out_shape=jax.ShapeDtypeStruct((N, H), out_dtype),
        grid_spec=pltpu.PrefetchScalarGridSpec(
            num_scalar_prefetch=0,
            grid=grid,
            in_specs=[
                pl.BlockSpec((tm, tk), lambda i, k: (i, k)),   # x tile
                pl.BlockSpec((tk, H), lambda i, k: (k, 0)),    # W tile
                pl.BlockSpec((1, H), lambda i, k: (0, 0)),     # bias       (resident)
                pl.BlockSpec((tm, H), lambda i, k: (i, 0)),    # residual   (resident over k)
                pl.BlockSpec((1, H), lambda i, k: (0, 0)),     # LN gamma   (resident)
                pl.BlockSpec((1, H), lambda i, k: (0, 0)),     # LN beta    (resident)
                pl.BlockSpec((1, H), lambda i, k: (0, 0)),     # grow_mask  (resident)
            ],
            out_specs=pl.BlockSpec((tm, H), lambda i, k: (i, 0)),
            scratch_shapes=[pltpu.VMEM((tm, H), jnp.float32)],
        ),
        compiler_params=pltpu.CompilerParams(
            dimension_semantics=("parallel", "arbitrary")),
        cost_estimate=cost,
    )(x, w, b, res, g, beta, mask)
    return out.reshape(B, S, H)


def _reference(hidden_states, input_tensor, params, eps=LAYER_NORM_EPS, in_grow_dim=False):
    hp = jax.lax.Precision.HIGHEST
    h = jnp.dot(hidden_states.astype(jnp.float32),
                params["dense_w"].astype(jnp.float32).T, precision=hp)
    h = h + params["dense_b"].astype(jnp.float32)
    h = h + input_tensor.astype(jnp.float32)
    mean = jnp.mean(h, axis=-1, keepdims=True)
    var = jnp.mean((h - mean) ** 2, axis=-1, keepdims=True)
    h = (h - mean) * jax.lax.rsqrt(var + eps) * params["ln_w"].astype(jnp.float32) \
        + params["ln_b"].astype(jnp.float32)
    if in_grow_dim:
        h = h * params["grow_mask_vec"].astype(jnp.float32)
    return h


if __name__ == "__main__":
    # Small but lane-aligned shapes (128-multiples) so the real tiled layout is
    # exercised: grid = (2 row tiles, 2 reduction tiles).
    B, S = 4, 128          # batch, seq
    H = 256                # hidden_size
    I = 1024               # intermediate_size = 4 * hidden

    key = jax.random.PRNGKey(0)
    k_x, k_res, k_w, k_b = jax.random.split(key, 4)

    hidden_states = jax.random.normal(k_x, (B, S, I), dtype=jnp.float32)
    input_tensor = jax.random.normal(k_res, (B, S, H), dtype=jnp.float32)

    params = {
        "dense_w": 0.02 * jax.random.normal(k_w, (H, I), dtype=jnp.float32),
        "dense_b": 0.01 * jax.random.normal(k_b, (H,), dtype=jnp.float32),
        "ln_w": jnp.ones((H,), dtype=jnp.float32),          # LayerNorm gamma init
        "ln_b": jnp.zeros((H,), dtype=jnp.float32),         # LayerNorm beta init
        "grow_mask_vec": jnp.ones((H,), dtype=jnp.float32), # CONSTANT_MAX_MASK_VAL
    }

    # fp32 path
    out = jax.block_until_ready(bert_output_ex(hidden_states, input_tensor, params))
    ref = _reference(hidden_states, input_tensor, params).reshape(B, S, H)
    assert out.shape == (B, S, H)
    assert jnp.allclose(out, ref, atol=1e-2, rtol=1e-2), "fp32 mismatch vs reference"

    # bf16 operands (MXU fast path), fp32 accumulation inside the kernel.
    hs_bf16 = hidden_states.astype(jnp.bfloat16)
    res_bf16 = input_tensor.astype(jnp.bfloat16)
    params_bf16 = {k: v.astype(jnp.bfloat16) for k, v in params.items()}
    out_bf16 = jax.block_until_ready(bert_output_ex(hs_bf16, res_bf16, params_bf16))
    ref_bf16 = _reference(hs_bf16, res_bf16, params_bf16).reshape(B, S, H)
    assert jnp.allclose(out_bf16.astype(jnp.float32), ref_bf16,
                        atol=5e-2, rtol=5e-2), "bf16 mismatch vs reference"

    print("KERNEL_OK")
</pallas_src>

<mosaic_0001>
module attributes {stable_mosaic.version = 11 : i64} {
  func.func @_bert_output_kernel(%arg0: i32, %arg1: i32, %arg2: memref<256x512xf32, #tpu.memory_space<vmem>>, %arg3: memref<512x256xf32, #tpu.memory_space<vmem>>, %arg4: memref<1x256xf32, #tpu.memory_space<vmem>>, %arg5: memref<256x256xf32, #tpu.memory_space<vmem>>, %arg6: memref<1x256xf32, #tpu.memory_space<vmem>>, %arg7: memref<1x256xf32, #tpu.memory_space<vmem>>, %arg8: memref<1x256xf32, #tpu.memory_space<vmem>>, %arg9: memref<256x256xf32, #tpu.memory_space<vmem>>, %arg10: memref<256x256xf32, #tpu.memory_space<vmem>>) attributes {dimension_semantics = [#tpu.dimension_semantics<parallel>, #tpu.dimension_semantics<arbitrary>], iteration_bounds = array<i64: 2, 2>, scalar_prefetch = 0 : i64, scratch_operands = 1 : i64, tpu.core_type = #tpu.core_type<tc>, window_params = [{transform_indices = @transform_0, window_bounds = array<i64: 256, 512>}, {transform_indices = @transform_1, window_bounds = array<i64: 512, 256>}, {pipeline_mode = #tpu.pipeline_mode<synchronous>, transform_indices = @transform_2, window_bounds = array<i64: 1, 256>}, {transform_indices = @transform_3, window_bounds = array<i64: 256, 256>}, {pipeline_mode = #tpu.pipeline_mode<synchronous>, transform_indices = @transform_4, window_bounds = array<i64: 1, 256>}, {pipeline_mode = #tpu.pipeline_mode<synchronous>, transform_indices = @transform_5, window_bounds = array<i64: 1, 256>}, {pipeline_mode = #tpu.pipeline_mode<synchronous>, transform_indices = @transform_6, window_bounds = array<i64: 1, 256>}, {transform_indices = @transform_7, window_bounds = array<i64: 256, 256>}]} {
    %c0_i32 = arith.constant 0 : i32
    %0 = arith.cmpi eq, %arg1, %c0_i32 : i32
    %1 = arith.extui %0 : i1 to i32
    %c0_i32_0 = arith.constant 0 : i32
    %2 = arith.cmpi ne, %1, %c0_i32_0 : i32
    scf.if %2 {
      %cst_9 = arith.constant 0.000000e+00 : f32
      %12 = vector.broadcast %cst_9 : f32 to vector<256x256xf32>
      %c0_10 = arith.constant 0 : index
      %c0_11 = arith.constant 0 : index
      %13 = vector.load %arg10[%c0_10, %c0_11] : memref<256x256xf32, #tpu.memory_space<vmem>>, vector<256x256xf32>
      tpu.vector_store %arg10[%c0_10, %c0_11], %12 {strides = array<i32>} : memref<256x256xf32, #tpu.memory_space<vmem>>, vector<256x256xf32>,
    } else {
    }
    %c0 = arith.constant 0 : index
    %c0_1 = arith.constant 0 : index
    %3 = vector.load %arg10[%c0, %c0_1] : memref<256x256xf32, #tpu.memory_space<vmem>>, vector<256x256xf32>
    %c0_2 = arith.constant 0 : index
    %c0_3 = arith.constant 0 : index
    %4 = vector.load %arg2[%c0_2, %c0_3] : memref<256x512xf32, #tpu.memory_space<vmem>>, vector<256x512xf32>
    %c0_4 = arith.constant 0 : index
    %c0_5 = arith.constant 0 : index
    %5 = vector.load %arg3[%c0_4, %c0_5] : memref<512x256xf32, #tpu.memory_space<vmem>>, vector<512x256xf32>
    %cst = arith.constant dense<0.000000e+00> : vector<256x256xf32>
    %6 = tpu.matmul %4, %5, %cst {dimension_numbers = #tpu.dot_dimension_numbers<[1], [0], [0], [1], [0, 0, 1, 1], [], []>} : vector<256x512xf32>, vector<512x256xf32>, vector<256x256xf32> -> vector<256x256xf32>
    %7 = arith.addf %3, %6 : vector<256x256xf32>
    %c0_6 = arith.constant 0 : index
    %c0_7 = arith.constant 0 : index
    %8 = vector.load %arg10[%c0_6, %c0_7] : memref<256x256xf32, #tpu.memory_space<vmem>>, vector<256x256xf32>
    tpu.vector_store %arg10[%c0_6, %c0_7], %7 {strides = array<i32>} : memref<256x256xf32, #tpu.memory_space<vmem>>, vector<256x256xf32>,
    %c1_i32 = arith.constant 1 : i32
    %9 = arith.cmpi eq, %arg1, %c1_i32 : i32
    %10 = arith.extui %9 : i1 to i32
    %c0_i32_8 = arith.constant 0 : i32
    %11 = arith.cmpi ne, %10, %c0_i32_8 : i32
    scf.if %11 {
      %c0_9 = arith.constant 0 : index
      %c0_10 = arith.constant 0 : index
      %12 = vector.load %arg10[%c0_9, %c0_10] : memref<256x256xf32, #tpu.memory_space<vmem>>, vector<256x256xf32>
      %c0_11 = arith.constant 0 : index
      %c0_12 = arith.constant 0 : index
      %13 = vector.load %arg4[%c0_11, %c0_12] : memref<1x256xf32, #tpu.memory_space<vmem>>, vector<1x256xf32>
      %14 = vector.broadcast %13 : vector<1x256xf32> to vector<256x256xf32>
      %15 = arith.addf %12, %14 : vector<256x256xf32>
      %c0_13 = arith.constant 0 : index
      %c0_14 = arith.constant 0 : index
      %16 = vector.load %arg5[%c0_13, %c0_14] : memref<256x256xf32, #tpu.memory_space<vmem>>, vector<256x256xf32>
      %17 = arith.addf %15, %16 : vector<256x256xf32>
      %cst_15 = arith.constant dense<0.000000e+00> : vector<256xf32>
      %18 = vector.multi_reduction <add>, %17, %cst_15 [1] : vector<256x256xf32> to vector<256xf32>
      %19 = vector.shape_cast %18 : vector<256xf32> to vector<256x1xf32>
      %cst_16 = arith.constant 2.560000e+02 : f32
      %20 = vector.broadcast %cst_16 : f32 to vector<256x1xf32>
      %21 = arith.divf %19, %20 : vector<256x1xf32>
      %22 = vector.broadcast %21 : vector<256x1xf32> to vector<256x256xf32>
      %23 = arith.subf %17, %22 : vector<256x256xf32>
      %24 = arith.mulf %23, %23 : vector<256x256xf32>
      %cst_17 = arith.constant dense<0.000000e+00> : vector<256xf32>
      %25 = vector.multi_reduction <add>, %24, %cst_17 [1] : vector<256x256xf32> to vector<256xf32>
      %26 = vector.shape_cast %25 : vector<256xf32> to vector<256x1xf32>
      %cst_18 = arith.constant 2.560000e+02 : f32
      %27 = vector.broadcast %cst_18 : f32 to vector<256x1xf32>
      %28 = arith.divf %26, %27 : vector<256x1xf32>
      %cst_19 = arith.constant 9.99999996E-13 : f32
      %29 = vector.broadcast %cst_19 : f32 to vector<256x1xf32>
      %30 = arith.addf %28, %29 : vector<256x1xf32>
      %31 = math.rsqrt %30 : vector<256x1xf32>
      %32 = vector.broadcast %31 : vector<256x1xf32> to vector<256x256xf32>
      %33 = arith.mulf %23, %32 : vector<256x256xf32>
      %c0_20 = arith.constant 0 : index
      %c0_21 = arith.constant 0 : index
      %34 = vector.load %arg6[%c0_20, %c0_21] : memref<1x256xf32, #tpu.memory_space<vmem>>, vector<1x256xf32>
      %35 = vector.broadcast %34 : vector<1x256xf32> to vector<256x256xf32>
      %36 = arith.mulf %33, %35 : vector<256x256xf32>
      %c0_22 = arith.constant 0 : index
      %c0_23 = arith.constant 0 : index
      %37 = vector.load %arg7[%c0_22, %c0_23] : memref<1x256xf32, #tpu.memory_space<vmem>>, vector<1x256xf32>
      %38 = vector.broadcast %37 : vector<1x256xf32> to vector<256x256xf32>
      %39 = arith.addf %36, %38 : vector<256x256xf32>
      %c0_24 = arith.constant 0 : index
      %c0_25 = arith.constant 0 : index
      %40 = vector.load %arg9[%c0_24, %c0_25] : memref<256x256xf32, #tpu.memory_space<vmem>>, vector<256x256xf32>
      tpu.vector_store %arg9[%c0_24, %c0_25], %39 {strides = array<i32>} : memref<256x256xf32, #tpu.memory_space<vmem>>, vector<256x256xf32>,
    } else {
    }
    return
  }
  func.func @transform_0(%arg0: i32, %arg1: i32) -> (i32, i32) {
    %c0_i32 = arith.constant 0 : i32
    return %arg0, %arg1 : i32, i32
  }
  func.func @transform_1(%arg0: i32, %arg1: i32) -> (i32, i32) {
    %c0_i32 = arith.constant 0 : i32
    %c0_i32_0 = arith.constant 0 : i32
    return %arg1, %c0_i32 : i32, i32
  }
  func.func @transform_2(%arg0: i32, %arg1: i32) -> (i32, i32) {
    %c0_i32 = arith.constant 0 : i32
    %c0_i32_0 = arith.constant 0 : i32
    %c0_i32_1 = arith.constant 0 : i32
    return %c0_i32, %c0_i32_0 : i32, i32
  }
  func.func @transform_3(%arg0: i32, %arg1: i32) -> (i32, i32) {
    %c0_i32 = arith.constant 0 : i32
    %c0_i32_0 = arith.constant 0 : i32
    return %arg0, %c0_i32 : i32, i32
  }
  func.func @transform_4(%arg0: i32, %arg1: i32) -> (i32, i32) {
    %c0_i32 = arith.constant 0 : i32
    %c0_i32_0 = arith.constant 0 : i32
    %c0_i32_1 = arith.constant 0 : i32
    return %c0_i32, %c0_i32_0 : i32, i32
  }
  func.func @transform_5(%arg0: i32, %arg1: i32) -> (i32, i32) {
    %c0_i32 = arith.constant 0 : i32
    %c0_i32_0 = arith.constant 0 : i32
    %c0_i32_1 = arith.constant 0 : i32
    return %c0_i32, %c0_i32_0 : i32, i32
  }
  func.func @transform_6(%arg0: i32, %arg1: i32) -> (i32, i32) {
    %c0_i32 = arith.constant 0 : i32
    %c0_i32_0 = arith.constant 0 : i32
    %c0_i32_1 = arith.constant 0 : i32
    return %c0_i32, %c0_i32_0 : i32, i32
  }
  func.func @transform_7(%arg0: i32, %arg1: i32) -> (i32, i32) {
    %c0_i32 = arith.constant 0 : i32
    %c0_i32_0 = arith.constant 0 : i32
    return %arg0, %c0_i32 : i32, i32
  }
}

</mosaic_0001>

<llo_original>
// kernel: tpu_custom_call.1
$region0: #{tpu_custom_call.1}
  #allocation0 [shape = 'u32[]', space=smem, size = 0x4, offset = 0x4, fixed_abs, tag = 'smem constant byte address 0x4 - core index']
  #allocation1 [shape = 'u32[144,128]{1,0:T(1,128)}', space=vmem, size = 0x12000, scoped, tag = 'internal scratch']
  #allocation2 [shape = 'f32[256,256]{1,0:T(8,128)}', space=vmem, size = 0x40000, scoped, tag = 'scratch operand']
  %s0 = inlined_call_operand.hbm [shape: f32[512,1024], index: 0, kind: input, shape index: {}]
  %s1 = inlined_call_operand.hbm [shape: f32[1024,256], index: 1, kind: input, shape index: {}]
  %s2 = inlined_call_operand.hbm [shape: f32[1,256], index: 2, kind: input, shape index: {}]
  %s3 = inlined_call_operand.hbm [shape: f32[512,256], index: 3, kind: input, shape index: {}]
  %s4 = inlined_call_operand.hbm [shape: f32[1,256], index: 4, kind: input, shape index: {}]
  %s5 = inlined_call_operand.hbm [shape: f32[1,256], index: 5, kind: input, shape index: {}]
  %s6 = inlined_call_operand.hbm [shape: f32[1,256], index: 6, kind: input, shape index: {}]
  %s7 = inlined_call_operand.hbm [shape: f32[512,256], index: 7, kind: output, shape index: {}]
  %s8 = sld [smem:[#allocation0]]
  $region97: #{tpu_custom_call.1} parent=0
    _
  %s10 = ssub.s32 1, %s8
  %s11 = scalar_select 0, %s10, %s8
  $region1: #{tpu_custom_call.1} parent=0
    #allocation3 [shape = 'u8[1048576]{0}', space=vmem, size = 0x100000, scoped, tag = 'input window, operand 0']
    #allocation4 [shape = 's32[2]{0}', space=sflag, size = 0x8, scoped, tag = 'scoped memory for tpu_custom_call.1']
    #allocation5 [shape = 's32[2]{0}', space=sflag, size = 0x8, scoped, tag = 'scoped memory for tpu_custom_call.1']
    #allocation6 [shape = 'u8[1048576]{0}', space=vmem, size = 0x100000, scoped, tag = 'input window, operand 1']
    #allocation7 [shape = 's32[2]{0}', space=sflag, size = 0x8, scoped, tag = 'scoped memory for tpu_custom_call.1']
    #allocation8 [shape = 'u8[1024]{0}', space=vmem, size = 0x400, scoped, tag = 'input window, operand 2, single buffered']
    #allocation9 [shape = 'u8[524288]{0}', space=vmem, size = 0x80000, scoped, tag = 'input window, operand 3']
    #allocation10 [shape = 's32[2]{0}', space=sflag, size = 0x8, scoped, tag = 'scoped memory for tpu_custom_call.1']
    #allocation11 [shape = 'u8[1024]{0}', space=vmem, size = 0x400, scoped, tag = 'input window, operand 4, single buffered']
    #allocation12 [shape = 'u8[1024]{0}', space=vmem, size = 0x400, scoped, tag = 'input window, operand 5, single buffered']
    #allocation13 [shape = 's32[1]{0}', space=sflag, size = 0x4, scoped, tag = 'scoped memory for tpu_custom_call.1']
    #allocation14 [shape = 'u8[1024]{0}', space=vmem, size = 0x400, scoped, tag = 'input window, operand 6, single buffered']
    #allocation15 [shape = 'u8[524288]{0}', space=vmem, size = 0x80000, scoped, tag = 'output window, operand 0']
    %12 = vsyncpa [#allocation4], 0
    %s13 = scalar_lea.sflag [#allocation4], 1
    %14 = vsyncpa %s13, 0
    %15 = vsyncpa [#allocation7], 0
    %s16 = scalar_lea.sflag [#allocation7], 1
    %17 = vsyncpa %s16, 0
    %18 = vsyncpa [#allocation10], 0
    %s19 = scalar_lea.sflag [#allocation10], 1
    %20 = vsyncpa %s19, 0
    %21 = vsyncpa [#allocation13], 0
    %22 = vsyncpa [#allocation5], 0
    %s23 = scalar_lea.sflag [#allocation5], 1
    %24 = vsyncpa %s23, 0
    loop: start=0, step=1, limit=6
    $region2: #{tpu_custom_call.1} parent=1 // loop_pre_header
      _
    $region3: #{tpu_custom_call.1} parent=1 // loop_header
      %s26 = sphi 0, %s30
      %p27 = scmp.ge.s32.totalorder %s26, 6
      %s33 = sphi 0, %s45
      %s34 = sphi 0, %s41
      %s35 = sphi 0, %s33
      %s36 = sphi 0, %s34
      %s37 = sphi 0, %s35
      %s38 = sphi 0, %s36
      %s50 = sphi 0, %s52
      %s53 = sphi 0, %s50
      %s54 = sphi 0, %s53
      %s70 = sphi 0, %s54
      %s76 = sphi 0, %s78
      %s79 = sphi 0, %s76
      %s80 = sphi 0, %s79
      %s96 = sphi 0, %s80
      %s100 = sphi 0, %s100
      %s102 = sphi 0, %s100
      %s103 = sphi 0, %s102
      %s117 = sphi 0, %s103
      %s123 = sphi 0, %s125
      %s126 = sphi 0, %s123
      %s127 = sphi 0, %s126
      %s143 = sphi 0, %s127
      %s147 = sphi 0, %s147
      %s149 = sphi 0, %s147
      %s150 = sphi 0, %s149
      %s164 = sphi 0, %s150
      %s168 = sphi 0, %s168
      %s170 = sphi 0, %s168
      %s171 = sphi 0, %s170
      %s185 = sphi 0, %s171
      %s189 = sphi 0, %s189
      %s191 = sphi 0, %s189
      %s192 = sphi 0, %s191
      %s206 = sphi 0, %s192
      %s212 = sphi 0, %s214
      %s215 = sphi 0, %s212
      %s216 = sphi 0, %s215
      %s232 = sphi 0, %s216
    $region4: #{tpu_custom_call.1} parent=1 // loop_header_branch
      %29 = sbr.rel (%p27) target = $region8
    $region5: #{tpu_custom_call.1} parent=1 // loop_body
      %s31 = ssub.s32 %s26, 1
      %s32 = ssub.s32 %s26, 2
      %s39 = sadd.s32 1, %s34
      %p40 = scmp.ge.s32.totalorder %s39, 2
      %s41 = scalar_select %p40, 0, %s39
      %s42 = sadd.s32 1, %s33
      %s43 = scalar_select %p40, %s42, %s33
      %p44 = scmp.ge.s32.totalorder %s43, 2
      %s45 = scalar_select %p44, 0, %s43
      %s46 = ssub.s32 %s33, %s45
      %s47 = ssub.s32 %s34, %s41
      %s48 = sor.u32 %s46, %s47
      %p49 = scmp.eq.s32.totalorder %s48, 0
      %s51 = sadd.s32 %s50, 1
      %s52 = scalar_select %p49, %s50, %s51
      %p55 = pneg %p49
      %p56 = scmp.eq.s32.totalorder %s26, 3
      %p57 = por %p55, %p56
      %p58 = scmp.ne.s32.totalorder %s50, %s53
      %p59 = scmp.eq.s32.totalorder %s26, 0
      %p60 = por %p58, %p59
      %p61 = scmp.ne.s32.totalorder %s50, %s53
      %p62 = scmp.eq.s32.totalorder %s31, 3
      %p63 = por %p61, %p62
      %p64 = scmp.ne.s32.totalorder %s53, %s54
      %p65 = scmp.eq.s32.totalorder %s31, 0
      %p66 = por %p64, %p65
      %p67 = scmp.ne.s32.totalorder %s53, %s54
      %p68 = scmp.eq.s32.totalorder %s32, 3
      %p69 = por %p67, %p68
      %p71 = scmp.ne.s32.totalorder %s54, %s70
      %p72 = scmp.eq.s32.totalorder %s32, 0
      %p73 = por %p71, %p72
      %s74 = ssub.s32 %s34, %s41
      %p75 = scmp.eq.s32.totalorder %s74, 0
      %s77 = sadd.s32 %s76, 1
      %s78 = scalar_select %p75, %s76, %s77
      %p81 = pneg %p75
      %p82 = scmp.eq.s32.totalorder %s26, 3
      %p83 = por %p81, %p82
      %p84 = scmp.ne.s32.totalorder %s76, %s79
      %p85 = scmp.eq.s32.totalorder %s26, 0
      %p86 = por %p84, %p85
      %p87 = scmp.ne.s32.totalorder %s76, %s79
      %p88 = scmp.eq.s32.totalorder %s31, 3
      %p89 = por %p87, %p88
      %p90 = scmp.ne.s32.totalorder %s79, %s80
      %p91 = scmp.eq.s32.totalorder %s31, 0
      %p92 = por %p90, %p91
      %p93 = scmp.ne.s32.totalorder %s79, %s80
      %p94 = scmp.eq.s32.totalorder %s32, 3
      %p95 = por %p93, %p94
      %p97 = scmp.ne.s32.totalorder %s80, %s96
      %p98 = scmp.eq.s32.totalorder %s32, 0
      %p99 = por %p97, %p98
      %s101 = sadd.s32 %s100, 1
      %p104 = scmp.eq.s32.totalorder %s26, 3
      %p105 = scmp.ne.s32.totalorder %s100, %s102
      %p106 = scmp.eq.s32.totalorder %s26, 0
      %p107 = por %p105, %p106
      %p108 = scmp.ne.s32.totalorder %s100, %s102
      %p109 = scmp.eq.s32.totalorder %s31, 3
      %p110 = por %p108, %p109
      %p111 = scmp.ne.s32.totalorder %s102, %s103
      %p112 = scmp.eq.s32.totalorder %s31, 0
      %p113 = por %p111, %p112
      %p114 = scmp.ne.s32.totalorder %s102, %s103
      %p115 = scmp.eq.s32.totalorder %s32, 3
      %p116 = por %p114, %p115
      %p118 = scmp.ne.s32.totalorder %s103, %s117
      %p119 = scmp.eq.s32.totalorder %s32, 0
      %p120 = por %p118, %p119
      %s121 = ssub.s32 %s33, %s45
      %p122 = scmp.eq.s32.totalorder %s121, 0
      %s124 = sadd.s32 %s123, 1
      %s125 = scalar_select %p122, %s123, %s124
      %p128 = pneg %p122
      %p129 = scmp.eq.s32.totalorder %s26, 3
      %p130 = por %p128, %p129
      %p131 = scmp.ne.s32.totalorder %s123, %s126
      %p132 = scmp.eq.s32.totalorder %s26, 0
      %p133 = por %p131, %p132
      %p134 = scmp.ne.s32.totalorder %s123, %s126
      %p135 = scmp.eq.s32.totalorder %s31, 3
      %p136 = por %p134, %p135
      %p137 = scmp.ne.s32.totalorder %s126, %s127
      %p138 = scmp.eq.s32.totalorder %s31, 0
      %p139 = por %p137, %p138
      %p140 = scmp.ne.s32.totalorder %s126, %s127
      %p141 = scmp.eq.s32.totalorder %s32, 3
      %p142 = por %p140, %p141
      %p144 = scmp.ne.s32.totalorder %s127, %s143
      %p145 = scmp.eq.s32.totalorder %s32, 0
      %p146 = por %p144, %p145
      %s148 = sadd.s32 %s147, 1
      %p151 = scmp.eq.s32.totalorder %s26, 3
      %p152 = scmp.ne.s32.totalorder %s147, %s149
      %p153 = scmp.eq.s32.totalorder %s26, 0
      %p154 = por %p152, %p153
      %p155 = scmp.ne.s32.totalorder %s147, %s149
      %p156 = scmp.eq.s32.totalorder %s31, 3
      %p157 = por %p155, %p156
      %p158 = scmp.ne.s32.totalorder %s149, %s150
      %p159 = scmp.eq.s32.totalorder %s31, 0
      %p160 = por %p158, %p159
      %p161 = scmp.ne.s32.totalorder %s149, %s150
      %p162 = scmp.eq.s32.totalorder %s32, 3
      %p163 = por %p161, %p162
      %p165 = scmp.ne.s32.totalorder %s150, %s164
      %p166 = scmp.eq.s32.totalorder %s32, 0
      %p167 = por %p165, %p166
      %s169 = sadd.s32 %s168, 1
      %p172 = scmp.eq.s32.totalorder %s26, 3
      %p173 = scmp.ne.s32.totalorder %s168, %s170
      %p174 = scmp.eq.s32.totalorder %s26, 0
      %p175 = por %p173, %p174
      %p176 = scmp.ne.s32.totalorder %s168, %s170
      %p177 = scmp.eq.s32.totalorder %s31, 3
      %p178 = por %p176, %p177
      %p179 = scmp.ne.s32.totalorder %s170, %s171
      %p180 = scmp.eq.s32.totalorder %s31, 0
      %p181 = por %p179, %p180
      %p182 = scmp.ne.s32.totalorder %s170, %s171
      %p183 = scmp.eq.s32.totalorder %s32, 3
      %p184 = por %p182, %p183
      %p186 = scmp.ne.s32.totalorder %s171, %s185
      %p187 = scmp.eq.s32.totalorder %s32, 0
      %p188 = por %p186, %p187
      %s190 = sadd.s32 %s189, 1
      %p193 = scmp.eq.s32.totalorder %s26, 3
      %p194 = scmp.ne.s32.totalorder %s189, %s191
      %p195 = scmp.eq.s32.totalorder %s26, 0
      %p196 = por %p194, %p195
      %p197 = scmp.ne.s32.totalorder %s189, %s191
      %p198 = scmp.eq.s32.totalorder %s31, 3
      %p199 = por %p197, %p198
      %p200 = scmp.ne.s32.totalorder %s191, %s192
      %p201 = scmp.eq.s32.totalorder %s31, 0
      %p202 = por %p200, %p201
      %p203 = scmp.ne.s32.totalorder %s191, %s192
      %p204 = scmp.eq.s32.totalorder %s32, 3
      %p205 = por %p203, %p204
      %p207 = scmp.ne.s32.totalorder %s192, %s206
      %p208 = scmp.eq.s32.totalorder %s32, 0
      %p209 = por %p207, %p208
      %s210 = ssub.s32 %s33, %s45
      %p211 = scmp.eq.s32.totalorder %s210, 0
      %s213 = sadd.s32 %s212, 1
      %s214 = scalar_select %p211, %s212, %s213
      %p217 = pneg %p211
      %p218 = scmp.eq.s32.totalorder %s26, 3
      %p219 = por %p217, %p218
      %p220 = scmp.ne.s32.totalorder %s212, %s215
      %p221 = scmp.eq.s32.totalorder %s26, 0
      %p222 = por %p220, %p221
      %p223 = scmp.ne.s32.totalorder %s212, %s215
      %p224 = scmp.eq.s32.totalorder %s31, 3
      %p225 = por %p223, %p224
      %p226 = scmp.ne.s32.totalorder %s215, %s216
      %p227 = scmp.eq.s32.totalorder %s31, 0
      %p228 = por %p226, %p227
      %p229 = scmp.ne.s32.totalorder %s215, %s216
      %p230 = scmp.eq.s32.totalorder %s32, 3
      %p231 = por %p229, %p230
      %p233 = scmp.ne.s32.totalorder %s216, %s232
      %p234 = scmp.eq.s32.totalorder %s32, 0
      %p235 = por %p233, %p234
      %p236 = scmp.le.s32.totalorder 1, %s26
      %p237 = scmp.lt.s32.totalorder %s26, 5
      %p238 = pnand %p236, %p237
      %p239 = pneg %p238
      // Predicated region
      $region9: #{tpu_custom_call.1} parent=5 // pred_check
        _
      $region10: #{tpu_custom_call.1} parent=5 // pred_check_branch
        %241 = sbr.rel (%p238) target = $region12
      $region11: #{tpu_custom_call.1} parent=5 // pred_region
        %s242 = ssub.s32 %s26, 1
        // Predicated region
        $region13: #{tpu_custom_call.1} parent=11 // pred_check
          %p243 = pneg %p113
        $region14: #{tpu_custom_call.1} parent=11 // pred_check_branch
          %245 = sbr.rel (%p243) target = $region16
        $region15: #{tpu_custom_call.1} parent=11 // pred_region
          %s247 = ssub.s32 32, 32
          %248 = vsyncadd [#allocation7], %s247
          %s250 = sshll.u32 [#allocation8], 4
          %s251 = int_to_ptr.vmem [resolvable:$true] %s250
          %253 = dma.hbm_to_vmem [thread:$0]  %s2, 32, %s251, [#allocation7]
        $region16: #{tpu_custom_call.1} parent=11 // pred_fallthru
          _
        // Predicated region
        $region17: #{tpu_custom_call.1} parent=11 // pred_check
          %p254 = pneg %p160
        $region18: #{tpu_custom_call.1} parent=11 // pred_check_branch
          %256 = sbr.rel (%p254) target = $region20
        $region19: #{tpu_custom_call.1} parent=11 // pred_region
          %s258 = ssub.s32 32, 32
          %259 = vsyncadd [#allocation10], %s258
          %s261 = sshll.u32 [#allocation11], 4
          %s262 = int_to_ptr.vmem [resolvable:$true] %s261
          %264 = dma.hbm_to_vmem [thread:$0]  %s4, 32, %s262, [#allocation10]
        $region20: #{tpu_custom_call.1} parent=11 // pred_fallthru
          _
        // Predicated region
        $region21: #{tpu_custom_call.1} parent=11 // pred_check
          %p265 = pneg %p181
        $region22: #{tpu_custom_call.1} parent=11 // pred_check_branch
          %267 = sbr.rel (%p265) target = $region24
        $region23: #{tpu_custom_call.1} parent=11 // pred_region
          %s269 = ssub.s32 32, 32
          %270 = vsyncadd [#allocation13], %s269
          %s272 = sshll.u32 [#allocation12], 4
          %s273 = int_to_ptr.vmem [resolvable:$true] %s272
          %275 = dma.hbm_to_vmem [thread:$0]  %s5, 32, %s273, [#allocation13]
        $region24: #{tpu_custom_call.1} parent=11 // pred_fallthru
          _
        // Predicated region
        $region25: #{tpu_custom_call.1} parent=11 // pred_check
          %p276 = pneg %p202
        $region26: #{tpu_custom_call.1} parent=11 // pred_check_branch
          %278 = sbr.rel (%p276) target = $region28
        $region27: #{tpu_custom_call.1} parent=11 // pred_region
          %s280 = ssub.s32 32, 32
          %281 = vsyncadd [#allocation13], %s280
          %s283 = sshll.u32 [#allocation14], 4
          %s284 = int_to_ptr.vmem [resolvable:$true] %s283
          %286 = dma.hbm_to_vmem [thread:$0]  %s6, 32, %s284, [#allocation13]
        $region28: #{tpu_custom_call.1} parent=11 // pred_fallthru
          _
      $region12: #{tpu_custom_call.1} parent=5 // pred_fallthru
        _
      %p287 = scmp.lt.s32.totalorder %s26, 4
      // Predicated region
      $region29: #{tpu_custom_call.1} parent=5 // pred_check
        %p288 = pneg %p287
      $region30: #{tpu_custom_call.1} parent=5 // pred_check_branch
        %290 = sbr.rel (%p288) target = $region32
      $region31: #{tpu_custom_call.1} parent=5 // pred_region
        // Predicated region
        $region33: #{tpu_custom_call.1} parent=31 // pred_check
          %p291 = pneg %p60
        $region34: #{tpu_custom_call.1} parent=31 // pred_check_branch
          %293 = sbr.rel (%p291) target = $region36
        $region35: #{tpu_custom_call.1} parent=31 // pred_region
          %s294 = sand.u32 %s50, 1
          %s295 = scalar_lea.sflag [#allocation4], %s294
          %s296 = sand.u32 %s50, 1
          %s297 = smul.addr %s296, 1024
          %s298 = scalar_lea.vmem [#allocation3], %s297
          %s299 = smul.u32 32, %s33
          %s300 = smul.u32 4, %s34
          %s302 = ssub.s32 16384, 16384
          %303 = vsyncadd %s295, %s302
          %s304 = smul.addr %s299, 8
          %s305 = sadd.s32 %s300, %s304
          %s306 = smul.addr %s305, 128
          %s307 = scalar_lea.hbm %s0, %s306
          %s308 = sshll.u32 %s298, 4
          %s309 = int_to_ptr.vmem [resolvable:$true] %s308
          %314 = dma.hbm_to_vmem [thread:$0]  %s307, 16384, %s309, %s295, 1024, 512, 32
        $region36: #{tpu_custom_call.1} parent=31 // pred_fallthru
          _
        // Predicated region
        $region37: #{tpu_custom_call.1} parent=31 // pred_check
          %p315 = pneg %p86
        $region38: #{tpu_custom_call.1} parent=31 // pred_check_branch
          %317 = sbr.rel (%p315) target = $region40
        $region39: #{tpu_custom_call.1} parent=31 // pred_region
          %s318 = sand.u32 %s26, 1
          %s319 = scalar_lea.sflag [#allocation7], %s318
          %s320 = sand.u32 %s76, 1
          %s321 = smul.addr %s320, 1024
          %s322 = scalar_lea.vmem [#allocation6], %s321
          %s323 = smul.u32 64, %s34
          %s325 = ssub.s32 16384, 16384
          %326 = vsyncadd %s319, %s325
          %s327 = smul.addr %s323, 2
          %s328 = smul.addr %s327, 128
          %s329 = scalar_lea.hbm %s1, %s328
          %s330 = sshll.u32 %s322, 4
          %s331 = int_to_ptr.vmem [resolvable:$true] %s330
          %336 = dma.hbm_to_vmem [thread:$0]  %s329, 16384, %s331, %s319, 256, 256, 16
        $region40: #{tpu_custom_call.1} parent=31 // pred_fallthru
          _
        // Predicated region
        $region41: #{tpu_custom_call.1} parent=31 // pred_check
          %p337 = pneg %p133
        $region42: #{tpu_custom_call.1} parent=31 // pred_check_branch
          %339 = sbr.rel (%p337) target = $region44
        $region43: #{tpu_custom_call.1} parent=31 // pred_region
          %s340 = sand.u32 %s26, 1
          %s341 = scalar_lea.sflag [#allocation10], %s340
          %s342 = sand.u32 %s123, 1
          %s343 = smul.addr %s342, 512
          %s344 = scalar_lea.vmem [#allocation9], %s343
          %s345 = smul.u32 32, %s33
          %s347 = ssub.s32 8192, 8192
          %348 = vsyncadd %s341, %s347
          %s349 = smul.addr %s345, 2
          %s350 = smul.addr %s349, 128
          %s351 = scalar_lea.hbm %s3, %s350
          %s352 = sshll.u32 %s344, 4
          %s353 = int_to_ptr.vmem [resolvable:$true] %s352
          %358 = dma.hbm_to_vmem [thread:$0]  %s351, 8192, %s353, %s341, 256, 256, 16
        $region44: #{tpu_custom_call.1} parent=31 // pred_fallthru
          _
      $region32: #{tpu_custom_call.1} parent=5 // pred_fallthru
        _
      %p359 = scmp.le.s32.totalorder 1, %s26
      %p360 = scmp.lt.s32.totalorder %s26, 5
      %p361 = pnand %p359, %p360
      %p362 = pneg %p361
      // Predicated region
      $region45: #{tpu_custom_call.1} parent=5 // pred_check
        _
      $region46: #{tpu_custom_call.1} parent=5 // pred_check_branch
        %364 = sbr.rel (%p361) target = $region48
      $region47: #{tpu_custom_call.1} parent=5 // pred_region
        %s365 = ssub.s32 %s26, 1
        %s366 = sand.u32 %s53, 1
        %s367 = scalar_lea.sflag [#allocation4], %s366
        %s368 = sand.u32 %s53, 1
        %s369 = smul.addr %s368, 1024
        %s370 = scalar_lea.vmem [#allocation3], %s369
        // Predicated region
        $region49: #{tpu_custom_call.1} parent=47 // pred_check
          %p371 = pneg %p66
        $region50: #{tpu_custom_call.1} parent=47 // pred_check_branch
          %373 = sbr.rel (%p371) target = $region52
        $region51: #{tpu_custom_call.1} parent=47 // pred_region
          %374 = dma.done %s367, 16384
        $region52: #{tpu_custom_call.1} parent=47 // pred_fallthru
          _
        %s375 = sand.u32 %s31, 1
        %s376 = scalar_lea.sflag [#allocation7], %s375
        %s377 = sand.u32 %s79, 1
        %s378 = smul.addr %s377, 1024
        %s379 = scalar_lea.vmem [#allocation6], %s378
        // Predicated region
        $region53: #{tpu_custom_call.1} parent=47 // pred_check
          %p380 = pneg %p92
        $region54: #{tpu_custom_call.1} parent=47 // pred_check_branch
          %382 = sbr.rel (%p380) target = $region56
        $region55: #{tpu_custom_call.1} parent=47 // pred_region
          %383 = dma.done %s376, 16384
        $region56: #{tpu_custom_call.1} parent=47 // pred_fallthru
          _
        // Predicated region
        $region57: #{tpu_custom_call.1} parent=47 // pred_check
          %p384 = pneg %p113
        $region58: #{tpu_custom_call.1} parent=47 // pred_check_branch
          %386 = sbr.rel (%p384) target = $region60
        $region59: #{tpu_custom_call.1} parent=47 // pred_region
          %387 = dma.done [#allocation7], 32
        $region60: #{tpu_custom_call.1} parent=47 // pred_fallthru
          _
        %s388 = sand.u32 %s31, 1
        %s389 = scalar_lea.sflag [#allocation10], %s388
        %s390 = sand.u32 %s126, 1
        %s391 = smul.addr %s390, 512
        %s392 = scalar_lea.vmem [#allocation9], %s391
        // Predicated region
        $region61: #{tpu_custom_call.1} parent=47 // pred_check
          %p393 = pneg %p139
        $region62: #{tpu_custom_call.1} parent=47 // pred_check_branch
          %395 = sbr.rel (%p393) target = $region64
        $region63: #{tpu_custom_call.1} parent=47 // pred_region
          %396 = dma.done %s389, 8192
        $region64: #{tpu_custom_call.1} parent=47 // pred_fallthru
          _
        // Predicated region
        $region65: #{tpu_custom_call.1} parent=47 // pred_check
          %p397 = pneg %p160
        $region66: #{tpu_custom_call.1} parent=47 // pred_check_branch
          %399 = sbr.rel (%p397) target = $region68
        $region67: #{tpu_custom_call.1} parent=47 // pred_region
          %400 = dma.done [#allocation10], 32
        $region68: #{tpu_custom_call.1} parent=47 // pred_fallthru
          _
        // Predicated region
        $region69: #{tpu_custom_call.1} parent=47 // pred_check
          %p401 = pneg %p181
        $region70: #{tpu_custom_call.1} parent=47 // pred_check_branch
          %403 = sbr.rel (%p401) target = $region72
        $region71: #{tpu_custom_call.1} parent=47 // pred_region
          %404 = dma.done [#allocation13], 32
        $region72: #{tpu_custom_call.1} parent=47 // pred_fallthru
          _
        // Predicated region
        $region73: #{tpu_custom_call.1} parent=47 // pred_check
          %p405 = pneg %p202
        $region74: #{tpu_custom_call.1} parent=47 // pred_check_branch
          %407 = sbr.rel (%p405) target = $region76
        $region75: #{tpu_custom_call.1} parent=47 // pred_region
          %408 = dma.done [#allocation13], 32
        $region76: #{tpu_custom_call.1} parent=47 // pred_fallthru
          _
        %s409 = sand.u32 %s53, 1
        %s410 = scalar_lea.sflag [#allocation4], %s409
        %s411 = sand.u32 %s53, 1
        %s412 = smul.addr %s411, 1024
        %s413 = scalar_lea.vmem [#allocation3], %s412
        %p414 = pneg %p66
        %p415 = pneg %p63
        %s416 = sand.u32 %s31, 1
        %s417 = scalar_lea.sflag [#allocation7], %s416
        %s418 = sand.u32 %s79, 1
        %s419 = smul.addr %s418, 1024
        %s420 = scalar_lea.vmem [#allocation6], %s419
        %p421 = pneg %p92
        %p422 = pneg %p89
        %p423 = pneg %p113
        %p424 = pneg %p110
        %s425 = sand.u32 %s31, 1
        %s426 = scalar_lea.sflag [#allocation10], %s425
        %s427 = sand.u32 %s126, 1
        %s428 = smul.addr %s427, 512
        %s429 = scalar_lea.vmem [#allocation9], %s428
        %p430 = pneg %p139
        %p431 = pneg %p136
        %p432 = pneg %p160
        %p433 = pneg %p157
        %p434 = pneg %p181
        %p435 = pneg %p178
        %p436 = pneg %p202
        %p437 = pneg %p199
        %p438 = pneg %p228
        %p439 = pneg %p225
        %s440 = sand.u32 %s215, 1
        %s441 = scalar_lea.sflag [#allocation5], %s440
        %s442 = sand.u32 %s215, 1
        %s443 = smul.addr %s442, 512
        %s444 = scalar_lea.vmem [#allocation15], %s443
        %s445 = smul.u32 32, %s35
        %s446 = smul.u32 4, %s36
        %s447 = smul.u32 64, %s36
        %s448 = smul.u32 32, %s35
        %s449 = smul.u32 32, %s35
        %p450 = scmp.eq.s32.totalorder %s36, 0
        // Predicated region
        $region77: #{tpu_custom_call.1} parent=47 // pred_check
          %p451 = pneg %p450
        $region78: #{tpu_custom_call.1} parent=47 // pred_check_branch
          %453 = sbr.rel (%p451) target = $region80
        $region79: #{tpu_custom_call.1} parent=47 // pred_region
          %454 = vst [vmem:[#allocation2] sm:$0xff] 0.0
          %455 = vst [vmem:[#allocation2 + $0x8] sm:$0xff] 0.0
          %456 = vst [vmem:[#allocation2 + $0x10] sm:$0xff] 0.0
          %457 = vst [vmem:[#allocation2 + $0x18] sm:$0xff] 0.0
          %458 = vst [vmem:[#allocation2 + $0x20] sm:$0xff] 0.0
          %459 = vst [vmem:[#allocation2 + $0x28] sm:$0xff] 0.0
          %460 = vst [vmem:[#allocation2 + $0x30] sm:$0xff] 0.0
          %461 = vst [vmem:[#allocation2 + $0x38] sm:$0xff] 0.0
          %462 = vst [vmem:[#allocation2 + $0x40] sm:$0xff] 0.0
          %463 = vst [vmem:[#allocation2 + $0x48] sm:$0xff] 0.0
          %464 = vst [vmem:[#allocation2 + $0x50] sm:$0xff] 0.0
          %465 = vst [vmem:[#allocation2 + $0x58] sm:$0xff] 0.0
          %466 = vst [vmem:[#allocation2 + $0x60] sm:$0xff] 0.0
          %467 = vst [vmem:[#allocation2 + $0x68] sm:$0xff] 0.0
          %468 = vst [vmem:[#allocation2 + $0x70] sm:$0xff] 0.0
          %469 = vst [vmem:[#allocation2 + $0x78] sm:$0xff] 0.0
          %470 = vst [vmem:[#allocation2 + $0x80] sm:$0xff] 0.0
          %471 = vst [vmem:[#allocation2 + $0x88] sm:$0xff] 0.0
          %472 = vst [vmem:[#allocation2 + $0x90] sm:$0xff] 0.0
          %473 = vst [vmem:[#allocation2 + $0x98] sm:$0xff] 0.0
          %474 = vst [vmem:[#allocation2 + $0xa0] sm:$0xff] 0.0
          %475 = vst [vmem:[#allocation2 + $0xa8] sm:$0xff] 0.0
          %476 = vst [vmem:[#allocation2 + $0xb0] sm:$0xff] 0.0
          %477 = vst [vmem:[#allocation2 + $0xb8] sm:$0xff] 0.0
          %478 = vst [vmem:[#allocation2 + $0xc0] sm:$0xff] 0.0
          %479 = vst [vmem:[#allocation2 + $0xc8] sm:$0xff] 0.0
          %480 = vst [vmem:[#allocation2 + $0xd0] sm:$0xff] 0.0
          %481 = vst [vmem:[#allocation2 + $0xd8] sm:$0xff] 0.0
          %482 = vst [vmem:[#allocation2 + $0xe0] sm:$0xff] 0.0
          %483 = vst [vmem:[#allocation2 + $0xe8] sm:$0xff] 0.0
          %484 = vst [vmem:[#allocation2 + $0xf0] sm:$0xff] 0.0
          %485 = vst [vmem:[#allocation2 + $0xf8] sm:$0xff] 0.0
          %486 = vst [vmem:[#allocation2 + $0x100] sm:$0xff] 0.0
          %487 = vst [vmem:[#allocation2 + $0x108] sm:$0xff] 0.0
          %488 = vst [vmem:[#allocation2 + $0x110] sm:$0xff] 0.0
          %489 = vst [vmem:[#allocation2 + $0x118] sm:$0xff] 0.0
          %490 = vst [vmem:[#allocation2 + $0x120] sm:$0xff] 0.0
          %491 = vst [vmem:[#allocation2 + $0x128] sm:$0xff] 0.0
          %492 = vst [vmem:[#allocation2 + $0x130] sm:$0xff] 0.0
          %493 = vst [vmem:[#allocation2 + $0x138] sm:$0xff] 0.0
          %494 = vst [vmem:[#allocation2 + $0x140] sm:$0xff] 0.0
          %495 = vst [vmem:[#allocation2 + $0x148] sm:$0xff] 0.0
          %496 = vst [vmem:[#allocation2 + $0x150] sm:$0xff] 0.0
          %497 = vst [vmem:[#allocation2 + $0x158] sm:$0xff] 0.0
          %498 = vst [vmem:[#allocation2 + $0x160] sm:$0xff] 0.0
          %499 = vst [vmem:[#allocation2 + $0x168] sm:$0xff] 0.0
          %500 = vst [vmem:[#allocation2 + $0x170] sm:$0xff] 0.0
          %501 = vst [vmem:[#allocation2 + $0x178] sm:$0xff] 0.0
          %502 = vst [vmem:[#allocation2 + $0x180] sm:$0xff] 0.0
          %503 = vst [vmem:[#allocation2 + $0x188] sm:$0xff] 0.0
          %504 = vst [vmem:[#allocation2 + $0x190] sm:$0xff] 0.0
          %505 = vst [vmem:[#allocation2 + $0x198] sm:$0xff] 0.0
          %506 = vst [vmem:[#allocation2 + $0x1a0] sm:$0xff] 0.0
          %507 = vst [vmem:[#allocation2 + $0x1a8] sm:$0xff] 0.0
          %508 = vst [vmem:[#allocation2 + $0x1b0] sm:$0xff] 0.0
          %509 = vst [vmem:[#allocation2 + $0x1b8] sm:$0xff] 0.0
          %510 = vst [vmem:[#allocation2 + $0x1c0] sm:$0xff] 0.0
          %511 = vst [vmem:[#allocation2 + $0x1c8] sm:$0xff] 0.0
          %512 = vst [vmem:[#allocation2 + $0x1d0] sm:$0xff] 0.0
          %513 = vst [vmem:[#allocation2 + $0x1d8] sm:$0xff] 0.0
          %514 = vst [vmem:[#allocation2 + $0x1e0] sm:$0xff] 0.0
          %515 = vst [vmem:[#allocation2 + $0x1e8] sm:$0xff] 0.0
          %516 = vst [vmem:[#allocation2 + $0x1f0] sm:$0xff] 0.0
          %517 = vst [vmem:[#allocation2 + $0x1f8] sm:$0xff] 0.0
        $region80: #{tpu_custom_call.1} parent=47 // pred_fallthru
          _
        %v518 = vld [vmem:[#allocation2] sm:$0xff]
        %v519 = vld [vmem:[#allocation2 + $0x8] sm:$0xff]
        %v520 = vld [vmem:[#allocation2 + $0x10] sm:$0xff]
        %v521 = vld [vmem:[#allocation2 + $0x18] sm:$0xff]
        %v522 = vld [vmem:[#allocation2 + $0x20] sm:$0xff]
        %v523 = vld [vmem:[#allocation2 + $0x28] sm:$0xff]
        %v524 = vld [vmem:[#allocation2 + $0x30] sm:$0xff]
        %v525 = vld [vmem:[#allocation2 + $0x38] sm:$0xff]
        %v526 = vld [vmem:[#allocation2 + $0x40] sm:$0xff]
        %v527 = vld [vmem:[#allocation2 + $0x48] sm:$0xff]
        %v528 = vld [vmem:[#allocation2 + $0x50] sm:$0xff]
        %v529 = vld [vmem:[#allocation2 + $0x58] sm:$0xff]
        %v530 = vld [vmem:[#allocation2 + $0x60] sm:$0xff]
        %v531 = vld [vmem:[#allocation2 + $0x68] sm:$0xff]
        %v532 = vld [vmem:[#allocation2 + $0x70] sm:$0xff]
        %v533 = vld [vmem:[#allocation2 + $0x78] sm:$0xff]
        %v534 = vld [vmem:[#allocation2 + $0x80] sm:$0xff]
        %v535 = vld [vmem:[#allocation2 + $0x88] sm:$0xff]
        %v536 = vld [vmem:[#allocation2 + $0x90] sm:$0xff]
        %v537 = vld [vmem:[#allocation2 + $0x98] sm:$0xff]
        %v538 = vld [vmem:[#allocation2 + $0xa0] sm:$0xff]
        %v539 = vld [vmem:[#allocation2 + $0xa8] sm:$0xff]
        %v540 = vld [vmem:[#allocation2 + $0xb0] sm:$0xff]
        %v541 = vld [vmem:[#allocation2 + $0xb8] sm:$0xff]
        %v542 = vld [vmem:[#allocation2 + $0xc0] sm:$0xff]
        %v543 = vld [vmem:[#allocation2 + $0xc8] sm:$0xff]
        %v544 = vld [vmem:[#allocation2 + $0xd0] sm:$0xff]
        %v545 = vld [vmem:[#allocation2 + $0xd8] sm:$0xff]
        %v546 = vld [vmem:[#allocation2 + $0xe0] sm:$0xff]
        %v547 = vld [vmem:[#allocation2 + $0xe8] sm:$0xff]
        %v548 = vld [vmem:[#allocation2 + $0xf0] sm:$0xff]
        %v549 = vld [vmem:[#allocation2 + $0xf8] sm:$0xff]
        %v550 = vld [vmem:[#allocation2 + $0x100] sm:$0xff]
        %v551 = vld [vmem:[#allocation2 + $0x108] sm:$0xff]
        %v552 = vld [vmem:[#allocation2 + $0x110] sm:$0xff]
        %v553 = vld [vmem:[#allocation2 + $0x118] sm:$0xff]
        %v554 = vld [vmem:[#allocation2 + $0x120] sm:$0xff]
        %v555 = vld [vmem:[#allocation2 + $0x128] sm:$0xff]
        %v556 = vld [vmem:[#allocation2 + $0x130] sm:$0xff]
        %v557 = vld [vmem:[#allocation2 + $0x138] sm:$0xff]
        %v558 = vld [vmem:[#allocation2 + $0x140] sm:$0xff]
        %v559 = vld [vmem:[#allocation2 + $0x148] sm:$0xff]
        %v560 = vld [vmem:[#allocation2 + $0x150] sm:$0xff]
        %v561 = vld [vmem:[#allocation2 + $0x158] sm:$0xff]
        %v562 = vld [vmem:[#allocation2 + $0x160] sm:$0xff]
        %v563 = vld [vmem:[#allocation2 + $0x168] sm:$0xff]
        %v564 = vld [vmem:[#allocation2 + $0x170] sm:$0xff]
        %v565 = vld [vmem:[#allocation2 + $0x178] sm:$0xff]
        %v566 = vld [vmem:[#allocation2 + $0x180] sm:$0xff]
        %v567 = vld [vmem:[#allocation2 + $0x188] sm:$0xff]
        %v568 = vld [vmem:[#allocation2 + $0x190] sm:$0xff]
        %v569 = vld [vmem:[#allocation2 + $0x198] sm:$0xff]
        %v570 = vld [vmem:[#allocation2 + $0x1a0] sm:$0xff]
        %v571 = vld [vmem:[#allocation2 + $0x1a8] sm:$0xff]
        %v572 = vld [vmem:[#allocation2 + $0x1b0] sm:$0xff]
        %v573 = vld [vmem:[#allocation2 + $0x1b8] sm:$0xff]
        %v574 = vld [vmem:[#allocation2 + $0x1c0] sm:$0xff]
        %v575 = vld [vmem:[#allocation2 + $0x1c8] sm:$0xff]
        %v576 = vld [vmem:[#allocation2 + $0x1d0] sm:$0xff]
        %v577 = vld [vmem:[#allocation2 + $0x1d8] sm:$0xff]
        %v578 = vld [vmem:[#allocation2 + $0x1e0] sm:$0xff]
        %v579 = vld [vmem:[#allocation2 + $0x1e8] sm:$0xff]
        %v580 = vld [vmem:[#allocation2 + $0x1f0] sm:$0xff]
        %v581 = vld [vmem:[#allocation2 + $0x1f8] sm:$0xff]
        %v582 = vld [vmem:[%s370] sm:$0xff]
        %v583 = vld [vmem:[%s370 + $0x8] sm:$0xff]
        %v584 = vld [vmem:[%s370 + $0x10] sm:$0xff]
        %v585 = vld [vmem:[%s370 + $0x18] sm:$0xff]
        %v586 = vld [vmem:[%s370 + $0x20] sm:$0xff]
        %v587 = vld [vmem:[%s370 + $0x28] sm:$0xff]
        %v588 = vld [vmem:[%s370 + $0x30] sm:$0xff]
        %v589 = vld [vmem:[%s370 + $0x38] sm:$0xff]
        %v590 = vld [vmem:[%s370 + $0x40] sm:$0xff]
        %v591 = vld [vmem:[%s370 + $0x48] sm:$0xff]
        %v592 = vld [vmem:[%s370 + $0x50] sm:$0xff]
        %v593 = vld [vmem:[%s370 + $0x58] sm:$0xff]
        %v594 = vld [vmem:[%s370 + $0x60] sm:$0xff]
        %v595 = vld [vmem:[%s370 + $0x68] sm:$0xff]
        %v596 = vld [vmem:[%s370 + $0x70] sm:$0xff]
        %v597 = vld [vmem:[%s370 + $0x78] sm:$0xff]
        %v598 = vld [vmem:[%s370 + $0x80] sm:$0xff]
        %v599 = vld [vmem:[%s370 + $0x88] sm:$0xff]
        %v600 = vld [vmem:[%s370 + $0x90] sm:$0xff]
        %v601 = vld [vmem:[%s370 + $0x98] sm:$0xff]
        %v602 = vld [vmem:[%s370 + $0xa0] sm:$0xff]
        %v603 = vld [vmem:[%s370 + $0xa8] sm:$0xff]
        %v604 = vld [vmem:[%s370 + $0xb0] sm:$0xff]
        %v605 = vld [vmem:[%s370 + $0xb8] sm:$0xff]
        %v606 = vld [vmem:[%s370 + $0xc0] sm:$0xff]
        %v607 = vld [vmem:[%s370 + $0xc8] sm:$0xff]
        %v608 = vld [vmem:[%s370 + $0xd0] sm:$0xff]
        %v609 = vld [vmem:[%s370 + $0xd8] sm:$0xff]
        %v610 = vld [vmem:[%s370 + $0xe0] sm:$0xff]
        %v611 = vld [vmem:[%s370 + $0xe8] sm:$0xff]
        %v612 = vld [vmem:[%s370 + $0xf0] sm:$0xff]
        %v613 = vld [vmem:[%s370 + $0xf8] sm:$0xff]
        %v614 = vld [vmem:[%s370 + $0x100] sm:$0xff]
        %v615 = vld [vmem:[%s370 + $0x108] sm:$0xff]
        %v616 = vld [vmem:[%s370 + $0x110] sm:$0xff]
        %v617 = vld [vmem:[%s370 + $0x118] sm:$0xff]
        %v618 = vld [vmem:[%s370 + $0x120] sm:$0xff]
        %v619 = vld [vmem:[%s370 + $0x128] sm:$0xff]
        %v620 = vld [vmem:[%s370 + $0x130] sm:$0xff]
        %v621 = vld [vmem:[%s370 + $0x138] sm:$0xff]
        %v622 = vld [vmem:[%s370 + $0x140] sm:$0xff]
        %v623 = vld [vmem:[%s370 + $0x148] sm:$0xff]
        %v624 = vld [vmem:[%s370 + $0x150] sm:$0xff]
        %v625 = vld [vmem:[%s370 + $0x158] sm:$0xff]
        %v626 = vld [vmem:[%s370 + $0x160] sm:$0xff]
        %v627 = vld [vmem:[%s370 + $0x168] sm:$0xff]
        %v628 = vld [vmem:[%s370 + $0x170] sm:$0xff]
        %v629 = vld [vmem:[%s370 + $0x178] sm:$0xff]
        %v630 = vld [vmem:[%s370 + $0x180] sm:$0xff]
        %v631 = vld [vmem:[%s370 + $0x188] sm:$0xff]
        %v632 = vld [vmem:[%s370 + $0x190] sm:$0xff]
        %v633 = vld [vmem:[%s370 + $0x198] sm:$0xff]
        %v634 = vld [vmem:[%s370 + $0x1a0] sm:$0xff]
        %v635 = vld [vmem:[%s370 + $0x1a8] sm:$0xff]
        %v636 = vld [vmem:[%s370 + $0x1b0] sm:$0xff]
        %v637 = vld [vmem:[%s370 + $0x1b8] sm:$0xff]
        %v638 = vld [vmem:[%s370 + $0x1c0] sm:$0xff]
        %v639 = vld [vmem:[%s370 + $0x1c8] sm:$0xff]
        %v640 = vld [vmem:[%s370 + $0x1d0] sm:$0xff]
        %v641 = vld [vmem:[%s370 + $0x1d8] sm:$0xff]
        %v642 = vld [vmem:[%s370 + $0x1e0] sm:$0xff]
        %v643 = vld [vmem:[%s370 + $0x1e8] sm:$0xff]
        %v644 = vld [vmem:[%s370 + $0x1f0] sm:$0xff]
        %v645 = vld [vmem:[%s370 + $0x1f8] sm:$0xff]
        %v646 = vld [vmem:[%s370 + $0x200] sm:$0xff]
        %v647 = vld [vmem:[%s370 + $0x208] sm:$0xff]
        %v648 = vld [vmem:[%s370 + $0x210] sm:$0xff]
        %v649 = vld [vmem:[%s370 + $0x218] sm:$0xff]
        %v650 = vld [vmem:[%s370 + $0x220] sm:$0xff]
        %v651 = vld [vmem:[%s370 + $0x228] sm:$0xff]
        %v652 = vld [vmem:[%s370 + $0x230] sm:$0xff]
        %v653 = vld [vmem:[%s370 + $0x238] sm:$0xff]
        %v654 = vld [vmem:[%s370 + $0x240] sm:$0xff]
        %v655 = vld [vmem:[%s370 + $0x248] sm:$0xff]
        %v656 = vld [vmem:[%s370 + $0x250] sm:$0xff]
        %v657 = vld [vmem:[%s370 + $0x258] sm:$0xff]
        %v658 = vld [vmem:[%s370 + $0x260] sm:$0xff]
        %v659 = vld [vmem:[%s370 + $0x268] sm:$0xff]
        %v660 = vld [vmem:[%s370 + $0x270] sm:$0xff]
        %v661 = vld [vmem:[%s370 + $0x278] sm:$0xff]
        %v662 = vld [vmem:[%s370 + $0x280] sm:$0xff]
        %v663 = vld [vmem:[%s370 + $0x288] sm:$0xff]
        %v664 = vld [vmem:[%s370 + $0x290] sm:$0xff]
        %v665 = vld [vmem:[%s370 + $0x298] sm:$0xff]
        %v666 = vld [vmem:[%s370 + $0x2a0] sm:$0xff]
        %v667 = vld [vmem:[%s370 + $0x2a8] sm:$0xff]
        %v668 = vld [vmem:[%s370 + $0x2b0] sm:$0xff]
        %v669 = vld [vmem:[%s370 + $0x2b8] sm:$0xff]
        %v670 = vld [vmem:[%s370 + $0x2c0] sm:$0xff]
        %v671 = vld [vmem:[%s370 + $0x2c8] sm:$0xff]
        %v672 = vld [vmem:[%s370 + $0x2d0] sm:$0xff]
        %v673 = vld [vmem:[%s370 + $0x2d8] sm:$0xff]
        %v674 = vld [vmem:[%s370 + $0x2e0] sm:$0xff]
        %v675 = vld [vmem:[%s370 + $0x2e8] sm:$0xff]
        %v676 = vld [vmem:[%s370 + $0x2f0] sm:$0xff]
        %v677 = vld [vmem:[%s370 + $0x2f8] sm:$0xff]
        %v678 = vld [vmem:[%s370 + $0x300] sm:$0xff]
        %v679 = vld [vmem:[%s370 + $0x308] sm:$0xff]
        %v680 = vld [vmem:[%s370 + $0x310] sm:$0xff]
        %v681 = vld [vmem:[%s370 + $0x318] sm:$0xff]
        %v682 = vld [vmem:[%s370 + $0x320] sm:$0xff]
        %v683 = vld [vmem:[%s370 + $0x328] sm:$0xff]
        %v684 = vld [vmem:[%s370 + $0x330] sm:$0xff]
        %v685 = vld [vmem:[%s370 + $0x338] sm:$0xff]
        %v686 = vld [vmem:[%s370 + $0x340] sm:$0xff]
        %v687 = vld [vmem:[%s370 + $0x348] sm:$0xff]
        %v688 = vld [vmem:[%s370 + $0x350] sm:$0xff]
        %v689 = vld [vmem:[%s370 + $0x358] sm:$0xff]
        %v690 = vld [vmem:[%s370 + $0x360] sm:$0xff]
        %v691 = vld [vmem:[%s370 + $0x368] sm:$0xff]
        %v692 = vld [vmem:[%s370 + $0x370] sm:$0xff]
        %v693 = vld [vmem:[%s370 + $0x378] sm:$0xff]
        %v694 = vld [vmem:[%s370 + $0x380] sm:$0xff]
        %v695 = vld [vmem:[%s370 + $0x388] sm:$0xff]
        %v696 = vld [vmem:[%s370 + $0x390] sm:$0xff]
        %v697 = vld [vmem:[%s370 + $0x398] sm:$0xff]
        %v698 = vld [vmem:[%s370 + $0x3a0] sm:$0xff]
        %v699 = vld [vmem:[%s370 + $0x3a8] sm:$0xff]
        %v700 = vld [vmem:[%s370 + $0x3b0] sm:$0xff]
        %v701 = vld [vmem:[%s370 + $0x3b8] sm:$0xff]
        %v702 = vld [vmem:[%s370 + $0x3c0] sm:$0xff]
        %v703 = vld [vmem:[%s370 + $0x3c8] sm:$0xff]
        %v704 = vld [vmem:[%s370 + $0x3d0] sm:$0xff]
        %v705 = vld [vmem:[%s370 + $0x3d8] sm:$0xff]
        %v706 = vld [vmem:[%s370 + $0x3e0] sm:$0xff]
        %v707 = vld [vmem:[%s370 + $0x3e8] sm:$0xff]
        %v708 = vld [vmem:[%s370 + $0x3f0] sm:$0xff]
        %v709 = vld [vmem:[%s370 + $0x3f8] sm:$0xff]
        %v710 = vld [vmem:[%s379] sm:$0xff]
        %v711 = vld [vmem:[%s379 + $0x8] sm:$0xff]
        %v712 = vld [vmem:[%s379 + $0x10] sm:$0xff]
        %v713 = vld [vmem:[%s379 + $0x18] sm:$0xff]
        %v714 = vld [vmem:[%s379 + $0x20] sm:$0xff]
        %v715 = vld [vmem:[%s379 + $0x28] sm:$0xff]
        %v716 = vld [vmem:[%s379 + $0x30] sm:$0xff]
        %v717 = vld [vmem:[%s379 + $0x38] sm:$0xff]
        %v718 = vld [vmem:[%s379 + $0x40] sm:$0xff]
        %v719 = vld [vmem:[%s379 + $0x48] sm:$0xff]
        %v720 = vld [vmem:[%s379 + $0x50] sm:$0xff]
        %v721 = vld [vmem:[%s379 + $0x58] sm:$0xff]
        %v722 = vld [vmem:[%s379 + $0x60] sm:$0xff]
        %v723 = vld [vmem:[%s379 + $0x68] sm:$0xff]
        %v724 = vld [vmem:[%s379 + $0x70] sm:$0xff]
        %v725 = vld [vmem:[%s379 + $0x78] sm:$0xff]
        %v726 = vld [vmem:[%s379 + $0x80] sm:$0xff]
        %v727 = vld [vmem:[%s379 + $0x88] sm:$0xff]
        %v728 = vld [vmem:[%s379 + $0x90] sm:$0xff]
        %v729 = vld [vmem:[%s379 + $0x98] sm:$0xff]
        %v730 = vld [vmem:[%s379 + $0xa0] sm:$0xff]
        %v731 = vld [vmem:[%s379 + $0xa8] sm:$0xff]
        %v732 = vld [vmem:[%s379 + $0xb0] sm:$0xff]
        %v733 = vld [vmem:[%s379 + $0xb8] sm:$0xff]
        %v734 = vld [vmem:[%s379 + $0xc0] sm:$0xff]
        %v735 = vld [vmem:[%s379 + $0xc8] sm:$0xff]
        %v736 = vld [vmem:[%s379 + $0xd0] sm:$0xff]
        %v737 = vld [vmem:[%s379 + $0xd8] sm:$0xff]
        %v738 = vld [vmem:[%s379 + $0xe0] sm:$0xff]
        %v739 = vld [vmem:[%s379 + $0xe8] sm:$0xff]
        %v740 = vld [vmem:[%s379 + $0xf0] sm:$0xff]
        %v741 = vld [vmem:[%s379 + $0xf8] sm:$0xff]
        %v742 = vld [vmem:[%s379 + $0x100] sm:$0xff]
        %v743 = vld [vmem:[%s379 + $0x108] sm:$0xff]
        %v744 = vld [vmem:[%s379 + $0x110] sm:$0xff]
        %v745 = vld [vmem:[%s379 + $0x118] sm:$0xff]
        %v746 = vld [vmem:[%s379 + $0x120] sm:$0xff]
        %v747 = vld [vmem:[%s379 + $0x128] sm:$0xff]
        %v748 = vld [vmem:[%s379 + $0x130] sm:$0xff]
        %v749 = vld [vmem:[%s379 + $0x138] sm:$0xff]
        %v750 = vld [vmem:[%s379 + $0x140] sm:$0xff]
        %v751 = vld [vmem:[%s379 + $0x148] sm:$0xff]
        %v752 = vld [vmem:[%s379 + $0x150] sm:$0xff]
        %v753 = vld [vmem:[%s379 + $0x158] sm:$0xff]
        %v754 = vld [vmem:[%s379 + $0x160] sm:$0xff]
        %v755 = vld [vmem:[%s379 + $0x168] sm:$0xff]
        %v756 = vld [vmem:[%s379 + $0x170] sm:$0xff]
        %v757 = vld [vmem:[%s379 + $0x178] sm:$0xff]
        %v758 = vld [vmem:[%s379 + $0x180] sm:$0xff]
        %v759 = vld [vmem:[%s379 + $0x188] sm:$0xff]
        %v760 = vld [vmem:[%s379 + $0x190] sm:$0xff]
        %v761 = vld [vmem:[%s379 + $0x198] sm:$0xff]
        %v762 = vld [vmem:[%s379 + $0x1a0] sm:$0xff]
        %v763 = vld [vmem:[%s379 + $0x1a8] sm:$0xff]
        %v764 = vld [vmem:[%s379 + $0x1b0] sm:$0xff]
        %v765 = vld [vmem:[%s379 + $0x1b8] sm:$0xff]
        %v766 = vld [vmem:[%s379 + $0x1c0] sm:$0xff]
        %v767 = vld [vmem:[%s379 + $0x1c8] sm:$0xff]
        %v768 = vld [vmem:[%s379 + $0x1d0] sm:$0xff]
        %v769 = vld [vmem:[%s379 + $0x1d8] sm:$0xff]
        %v770 = vld [vmem:[%s379 + $0x1e0] sm:$0xff]
        %v771 = vld [vmem:[%s379 + $0x1e8] sm:$0xff]
        %v772 = vld [vmem:[%s379 + $0x1f0] sm:$0xff]
        %v773 = vld [vmem:[%s379 + $0x1f8] sm:$0xff]
        %v774 = vld [vmem:[%s379 + $0x200] sm:$0xff]
        %v775 = vld [vmem:[%s379 + $0x208] sm:$0xff]
        %v776 = vld [vmem:[%s379 + $0x210] sm:$0xff]
        %v777 = vld [vmem:[%s379 + $0x218] sm:$0xff]
        %v778 = vld [vmem:[%s379 + $0x220] sm:$0xff]
        %v779 = vld [vmem:[%s379 + $0x228] sm:$0xff]
        %v780 = vld [vmem:[%s379 + $0x230] sm:$0xff]
        %v781 = vld [vmem:[%s379 + $0x238] sm:$0xff]
        %v782 = vld [vmem:[%s379 + $0x240] sm:$0xff]
        %v783 = vld [vmem:[%s379 + $0x248] sm:$0xff]
        %v784 = vld [vmem:[%s379 + $0x250] sm:$0xff]
        %v785 = vld [vmem:[%s379 + $0x258] sm:$0xff]
        %v786 = vld [vmem:[%s379 + $0x260] sm:$0xff]
        %v787 = vld [vmem:[%s379 + $0x268] sm:$0xff]
        %v788 = vld [vmem:[%s379 + $0x270] sm:$0xff]
        %v789 = vld [vmem:[%s379 + $0x278] sm:$0xff]
        %v790 = vld [vmem:[%s379 + $0x280] sm:$0xff]
        %v791 = vld [vmem:[%s379 + $0x288] sm:$0xff]
        %v792 = vld [vmem:[%s379 + $0x290] sm:$0xff]
        %v793 = vld [vmem:[%s379 + $0x298] sm:$0xff]
        %v794 = vld [vmem:[%s379 + $0x2a0] sm:$0xff]
        %v795 = vld [vmem:[%s379 + $0x2a8] sm:$0xff]
        %v796 = vld [vmem:[%s379 + $0x2b0] sm:$0xff]
        %v797 = vld [vmem:[%s379 + $0x2b8] sm:$0xff]
        %v798 = vld [vmem:[%s379 + $0x2c0] sm:$0xff]
        %v799 = vld [vmem:[%s379 + $0x2c8] sm:$0xff]
        %v800 = vld [vmem:[%s379 + $0x2d0] sm:$0xff]
        %v801 = vld [vmem:[%s379 + $0x2d8] sm:$0xff]
        %v802 = vld [vmem:[%s379 + $0x2e0] sm:$0xff]
        %v803 = vld [vmem:[%s379 + $0x2e8] sm:$0xff]
        %v804 = vld [vmem:[%s379 + $0x2f0] sm:$0xff]
        %v805 = vld [vmem:[%s379 + $0x2f8] sm:$0xff]
        %v806 = vld [vmem:[%s379 + $0x300] sm:$0xff]
        %v807 = vld [vmem:[%s379 + $0x308] sm:$0xff]
        %v808 = vld [vmem:[%s379 + $0x310] sm:$0xff]
        %v809 = vld [vmem:[%s379 + $0x318] sm:$0xff]
        %v810 = vld [vmem:[%s379 + $0x320] sm:$0xff]
        %v811 = vld [vmem:[%s379 + $0x328] sm:$0xff]
        %v812 = vld [vmem:[%s379 + $0x330] sm:$0xff]
        %v813 = vld [vmem:[%s379 + $0x338] sm:$0xff]
        %v814 = vld [vmem:[%s379 + $0x340] sm:$0xff]
        %v815 = vld [vmem:[%s379 + $0x348] sm:$0xff]
        %v816 = vld [vmem:[%s379 + $0x350] sm:$0xff]
        %v817 = vld [vmem:[%s379 + $0x358] sm:$0xff]
        %v818 = vld [vmem:[%s379 + $0x360] sm:$0xff]
        %v819 = vld [vmem:[%s379 + $0x368] sm:$0xff]
        %v820 = vld [vmem:[%s379 + $0x370] sm:$0xff]
        %v821 = vld [vmem:[%s379 + $0x378] sm:$0xff]
        %v822 = vld [vmem:[%s379 + $0x380] sm:$0xff]
        %v823 = vld [vmem:[%s379 + $0x388] sm:$0xff]
        %v824 = vld [vmem:[%s379 + $0x390] sm:$0xff]
        %v825 = vld [vmem:[%s379 + $0x398] sm:$0xff]
        %v826 = vld [vmem:[%s379 + $0x3a0] sm:$0xff]
        %v827 = vld [vmem:[%s379 + $0x3a8] sm:$0xff]
        %v828 = vld [vmem:[%s379 + $0x3b0] sm:$0xff]
        %v829 = vld [vmem:[%s379 + $0x3b8] sm:$0xff]
        %v830 = vld [vmem:[%s379 + $0x3c0] sm:$0xff]
        %v831 = vld [vmem:[%s379 + $0x3c8] sm:$0xff]
        %v832 = vld [vmem:[%s379 + $0x3d0] sm:$0xff]
        %v833 = vld [vmem:[%s379 + $0x3d8] sm:$0xff]
        %v834 = vld [vmem:[%s379 + $0x3e0] sm:$0xff]
        %v835 = vld [vmem:[%s379 + $0x3e8] sm:$0xff]
        %v836 = vld [vmem:[%s379 + $0x3f0] sm:$0xff]
        %v837 = vld [vmem:[%s379 + $0x3f8] sm:$0xff]
        %838 = vmatprep.subr.mxu0 %v741
        %839 = vmatpush1.msra.mxu0 %v740
        %840 = vmatprep.subr.mxu0 %v739
        %841 = vmatpush1.msra.mxu0 %v738
        %842 = vmatprep.subr.mxu0 %v737
        %843 = vmatpush1.msra.mxu0 %v736
        %844 = vmatprep.subr.mxu0 %v735
        %845 = vmatpush1.msra.mxu0 %v734
        %846 = vmatprep.subr.mxu0 %v733
        %847 = vmatpush1.msra.mxu0 %v732
        %848 = vmatprep.subr.mxu0 %v731
        %849 = vmatpush1.msra.mxu0 %v730
        %850 = vmatprep.subr.mxu0 %v729
        %851 = vmatpush1.msra.mxu0 %v728
        %852 = vmatprep.subr.mxu0 %v727
        %853 = vmatpush1.msra.mxu0 %v726
        %854 = vmatprep.subr.mxu0 %v725
        %855 = vmatpush1.msra.mxu0 %v724
        %856 = vmatprep.subr.mxu0 %v723
        %857 = vmatpush1.msra.mxu0 %v722
        %858 = vmatprep.subr.mxu0 %v721
        %859 = vmatpush1.msra.mxu0 %v720
        %860 = vmatprep.subr.mxu0 %v719
        %861 = vmatpush1.msra.mxu0 %v718
        %862 = vmatprep.subr.mxu0 %v717
        %863 = vmatpush1.msra.mxu0 %v716
        %864 = vmatprep.subr.mxu0 %v715
        %865 = vmatpush1.msra.mxu0 %v714
        %866 = vmatprep.subr.mxu0 %v713
        %867 = vmatpush1.msra.mxu0 %v712
        %868 = vmatprep.subr.mxu0 %v711
        %869 = vmatpush1.msra.mxu0 %v710
        %870 = vmatprep.subr.mxu0 %v773
        %871 = vmatpush2.msra.mxu0 %v772
        %872 = vmatprep.subr.mxu0 %v771
        %873 = vmatpush2.msra.mxu0 %v770
        %874 = vmatprep.subr.mxu0 %v769
        %875 = vmatpush2.msra.mxu0 %v768
        %876 = vmatprep.subr.mxu0 %v767
        %877 = vmatpush2.msra.mxu0 %v766
        %878 = vmatprep.subr.mxu0 %v765
        %879 = vmatpush2.msra.mxu0 %v764
        %880 = vmatprep.subr.mxu0 %v763
        %881 = vmatpush2.msra.mxu0 %v762
        %882 = vmatprep.subr.mxu0 %v761
        %883 = vmatpush2.msra.mxu0 %v760
        %884 = vmatprep.subr.mxu0 %v759
        %885 = vmatpush2.msra.mxu0 %v758
        %886 = vmatprep.subr.mxu0 %v757
        %887 = vmatpush2.msra.mxu0 %v756
        %888 = vmatprep.subr.mxu0 %v755
        %889 = vmatpush2.msra.mxu0 %v754
        %890 = vmatprep.subr.mxu0 %v753
        %891 = vmatpush2.msra.mxu0 %v752
        %892 = vmatprep.subr.mxu0 %v751
        %893 = vmatpush2.msra.mxu0 %v750
        %894 = vmatprep.subr.mxu0 %v749
        %895 = vmatpush2.msra.mxu0 %v748
        %896 = vmatprep.subr.mxu0 %v747
        %897 = vmatpush2.msra.mxu0 %v746
        %898 = vmatprep.subr.mxu0 %v745
        %899 = vmatpush2.msra.mxu0 %v744
        %900 = vmatprep.subr.mxu0 %v743
        %901 = vmatpush2.msra.mxu0 %v742
        %902 = vmatprep.mubr.f32.mxu0 %v583
        %903 = vmatmul.mubr.f32.gmra.mxu0 %v582
        %v904 = vpop.f32.mrf.mxu0
        %v905 = vadd.f32 0.0, %v904
        %v906 = vpop.f32.mrf.mxu0
        %v907 = vadd.f32 0.0, %v906
        %908 = vmatprep.mubr.f32.mxu0 %v587
        %909 = vmatmul.mubr.f32.gmra.mxu0 %v586
        %v910 = vpop.f32.mrf.mxu0
        %v911 = vadd.f32 0.0, %v910
        %v912 = vpop.f32.mrf.mxu0
        %v913 = vadd.f32 0.0, %v912
        %914 = vmatprep.mubr.f32.mxu0 %v591
        %915 = vmatmul.mubr.f32.gmra.mxu0 %v590
        %v916 = vpop.f32.mrf.mxu0
        %v917 = vadd.f32 0.0, %v916
        %v918 = vpop.f32.mrf.mxu0
        %v919 = vadd.f32 0.0, %v918
        %920 = vmatprep.mubr.f32.mxu0 %v595
        %921 = vmatmul.mubr.f32.gmra.mxu0 %v594
        %v922 = vpop.f32.mrf.mxu0
        %v923 = vadd.f32 0.0, %v922
        %v924 = vpop.f32.mrf.mxu0
        %v925 = vadd.f32 0.0, %v924
        %926 = vmatprep.mubr.f32.mxu0 %v599
        %927 = vmatmul.mubr.f32.gmra.mxu0 %v598
        %v928 = vpop.f32.mrf.mxu0
        %v929 = vadd.f32 0.0, %v928
        %v930 = vpop.f32.mrf.mxu0
        %v931 = vadd.f32 0.0, %v930
        %932 = vmatprep.mubr.f32.mxu0 %v603
        %933 = vmatmul.mubr.f32.gmra.mxu0 %v602
        %v934 = vpop.f32.mrf.mxu0
        %v935 = vadd.f32 0.0, %v934
        %v936 = vpop.f32.mrf.mxu0
        %v937 = vadd.f32 0.0, %v936
        %938 = vmatprep.mubr.f32.mxu0 %v607
        %939 = vmatmul.mubr.f32.gmra.mxu0 %v606
        %v940 = vpop.f32.mrf.mxu0
        %v941 = vadd.f32 0.0, %v940
        %v942 = vpop.f32.mrf.mxu0
        %v943 = vadd.f32 0.0, %v942
        %944 = vmatprep.mubr.f32.mxu0 %v611
        %945 = vmatmul.mubr.f32.gmra.mxu0 %v610
        %v946 = vpop.f32.mrf.mxu0
        %v947 = vadd.f32 0.0, %v946
        %v948 = vpop.f32.mrf.mxu0
        %v949 = vadd.f32 0.0, %v948
        %950 = vmatprep.mubr.f32.mxu0 %v615
        %951 = vmatmul.mubr.f32.gmra.mxu0 %v614
        %v952 = vpop.f32.mrf.mxu0
        %v953 = vadd.f32 0.0, %v952
        %v954 = vpop.f32.mrf.mxu0
        %v955 = vadd.f32 0.0, %v954
        %956 = vmatprep.mubr.f32.mxu0 %v619
        %957 = vmatmul.mubr.f32.gmra.mxu0 %v618
        %v958 = vpop.f32.mrf.mxu0
        %v959 = vadd.f32 0.0, %v958
        %v960 = vpop.f32.mrf.mxu0
        %v961 = vadd.f32 0.0, %v960
        %962 = vmatprep.mubr.f32.mxu0 %v623
        %963 = vmatmul.mubr.f32.gmra.mxu0 %v622
        %v964 = vpop.f32.mrf.mxu0
        %v965 = vadd.f32 0.0, %v964
        %v966 = vpop.f32.mrf.mxu0
        %v967 = vadd.f32 0.0, %v966
        %968 = vmatprep.mubr.f32.mxu0 %v627
        %969 = vmatmul.mubr.f32.gmra.mxu0 %v626
        %v970 = vpop.f32.mrf.mxu0
        %v971 = vadd.f32 0.0, %v970
        %v972 = vpop.f32.mrf.mxu0
        %v973 = vadd.f32 0.0, %v972
        %974 = vmatprep.mubr.f32.mxu0 %v631
        %975 = vmatmul.mubr.f32.gmra.mxu0 %v630
        %v976 = vpop.f32.mrf.mxu0
        %v977 = vadd.f32 0.0, %v976
        %v978 = vpop.f32.mrf.mxu0
        %v979 = vadd.f32 0.0, %v978
        %980 = vmatprep.mubr.f32.mxu0 %v635
        %981 = vmatmul.mubr.f32.gmra.mxu0 %v634
        %v982 = vpop.f32.mrf.mxu0
        %v983 = vadd.f32 0.0, %v982
        %v984 = vpop.f32.mrf.mxu0
        %v985 = vadd.f32 0.0, %v984
        %986 = vmatprep.mubr.f32.mxu0 %v639
        %987 = vmatmul.mubr.f32.gmra.mxu0 %v638
        %v988 = vpop.f32.mrf.mxu0
        %v989 = vadd.f32 0.0, %v988
        %v990 = vpop.f32.mrf.mxu0
        %v991 = vadd.f32 0.0, %v990
        %992 = vmatprep.mubr.f32.mxu0 %v643
        %993 = vmatmul.mubr.f32.gmra.mxu0 %v642
        %v994 = vpop.f32.mrf.mxu0
        %v995 = vadd.f32 0.0, %v994
        %v996 = vpop.f32.mrf.mxu0
        %v997 = vadd.f32 0.0, %v996
        %998 = vmatprep.mubr.f32.mxu0 %v647
        %999 = vmatmul.mubr.f32.gmra.mxu0 %v646
        %v1000 = vpop.f32.mrf.mxu0
        %v1001 = vadd.f32 0.0, %v1000
        %v1002 = vpop.f32.mrf.mxu0
        %v1003 = vadd.f32 0.0, %v1002
        %1004 = vmatprep.mubr.f32.mxu0 %v651
        %1005 = vmatmul.mubr.f32.gmra.mxu0 %v650
        %v1006 = vpop.f32.mrf.mxu0
        %v1007 = vadd.f32 0.0, %v1006
        %v1008 = vpop.f32.mrf.mxu0
        %v1009 = vadd.f32 0.0, %v1008
        %1010 = vmatprep.mubr.f32.mxu0 %v655
        %1011 = vmatmul.mubr.f32.gmra.mxu0 %v654
        %v1012 = vpop.f32.mrf.mxu0
        %v1013 = vadd.f32 0.0, %v1012
        %v1014 = vpop.f32.mrf.mxu0
        %v1015 = vadd.f32 0.0, %v1014
        %1016 = vmatprep.mubr.f32.mxu0 %v659
        %1017 = vmatmul.mubr.f32.gmra.mxu0 %v658
        %v1018 = vpop.f32.mrf.mxu0
        %v1019 = vadd.f32 0.0, %v1018
        %v1020 = vpop.f32.mrf.mxu0
        %v1021 = vadd.f32 0.0, %v1020
        %1022 = vmatprep.mubr.f32.mxu0 %v663
        %1023 = vmatmul.mubr.f32.gmra.mxu0 %v662
        %v1024 = vpop.f32.mrf.mxu0
        %v1025 = vadd.f32 0.0, %v1024
        %v1026 = vpop.f32.mrf.mxu0
        %v1027 = vadd.f32 0.0, %v1026
        %1028 = vmatprep.mubr.f32.mxu0 %v667
        %1029 = vmatmul.mubr.f32.gmra.mxu0 %v666
        %v1030 = vpop.f32.mrf.mxu0
        %v1031 = vadd.f32 0.0, %v1030
        %v1032 = vpop.f32.mrf.mxu0
        %v1033 = vadd.f32 0.0, %v1032
        %1034 = vmatprep.mubr.f32.mxu0 %v671
        %1035 = vmatmul.mubr.f32.gmra.mxu0 %v670
        %v1036 = vpop.f32.mrf.mxu0
        %v1037 = vadd.f32 0.0, %v1036
        %v1038 = vpop.f32.mrf.mxu0
        %v1039 = vadd.f32 0.0, %v1038
        %1040 = vmatprep.mubr.f32.mxu0 %v675
        %1041 = vmatmul.mubr.f32.gmra.mxu0 %v674
        %v1042 = vpop.f32.mrf.mxu0
        %v1043 = vadd.f32 0.0, %v1042
        %v1044 = vpop.f32.mrf.mxu0
        %v1045 = vadd.f32 0.0, %v1044
        %1046 = vmatprep.mubr.f32.mxu0 %v679
        %1047 = vmatmul.mubr.f32.gmra.mxu0 %v678
        %v1048 = vpop.f32.mrf.mxu0
        %v1049 = vadd.f32 0.0, %v1048
        %v1050 = vpop.f32.mrf.mxu0
        %v1051 = vadd.f32 0.0, %v1050
        %1052 = vmatprep.mubr.f32.mxu0 %v683
        %1053 = vmatmul.mubr.f32.gmra.mxu0 %v682
        %v1054 = vpop.f32.mrf.mxu0
        %v1055 = vadd.f32 0.0, %v1054
        %v1056 = vpop.f32.mrf.mxu0
        %v1057 = vadd.f32 0.0, %v1056
        %1058 = vmatprep.mubr.f32.mxu0 %v687
        %1059 = vmatmul.mubr.f32.gmra.mxu0 %v686
        %v1060 = vpop.f32.mrf.mxu0
        %v1061 = vadd.f32 0.0, %v1060
        %v1062 = vpop.f32.mrf.mxu0
        %v1063 = vadd.f32 0.0, %v1062
        %1064 = vmatprep.mubr.f32.mxu0 %v691
        %1065 = vmatmul.mubr.f32.gmra.mxu0 %v690
        %v1066 = vpop.f32.mrf.mxu0
        %v1067 = vadd.f32 0.0, %v1066
        %v1068 = vpop.f32.mrf.mxu0
        %v1069 = vadd.f32 0.0, %v1068
        %1070 = vmatprep.mubr.f32.mxu0 %v695
        %1071 = vmatmul.mubr.f32.gmra.mxu0 %v694
        %v1072 = vpop.f32.mrf.mxu0
        %v1073 = vadd.f32 0.0, %v1072
        %v1074 = vpop.f32.mrf.mxu0
        %v1075 = vadd.f32 0.0, %v1074
        %1076 = vmatprep.mubr.f32.mxu0 %v699
        %1077 = vmatmul.mubr.f32.gmra.mxu0 %v698
        %v1078 = vpop.f32.mrf.mxu0
        %v1079 = vadd.f32 0.0, %v1078
        %v1080 = vpop.f32.mrf.mxu0
        %v1081 = vadd.f32 0.0, %v1080
        %1082 = vmatprep.mubr.f32.mxu0 %v703
        %1083 = vmatmul.mubr.f32.gmra.mxu0 %v702
        %v1084 = vpop.f32.mrf.mxu0
        %v1085 = vadd.f32 0.0, %v1084
        %v1086 = vpop.f32.mrf.mxu0
        %v1087 = vadd.f32 0.0, %v1086
        %1088 = vmatprep.mubr.f32.mxu0 %v707
        %1089 = vmatmul.mubr.f32.gmra.mxu0 %v706
        %v1090 = vpop.f32.mrf.mxu0
        %v1091 = vadd.f32 0.0, %v1090
        %v1092 = vpop.f32.mrf.mxu0
        %v1093 = vadd.f32 0.0, %v1092
        %1094 = vdwg.mxu0
        %1095 = vmatprep.subr.mxu0 %v805
        %1096 = vmatpush1.msra.mxu0 %v804
        %1097 = vmatprep.subr.mxu0 %v803
        %1098 = vmatpush1.msra.mxu0 %v802
        %1099 = vmatprep.subr.mxu0 %v801
        %1100 = vmatpush1.msra.mxu0 %v800
        %1101 = vmatprep.subr.mxu0 %v799
        %1102 = vmatpush1.msra.mxu0 %v798
        %1103 = vmatprep.subr.mxu0 %v797
        %1104 = vmatpush1.msra.mxu0 %v796
        %1105 = vmatprep.subr.mxu0 %v795
        %1106 = vmatpush1.msra.mxu0 %v794
        %1107 = vmatprep.subr.mxu0 %v793
        %1108 = vmatpush1.msra.mxu0 %v792
        %1109 = vmatprep.subr.mxu0 %v791
        %1110 = vmatpush1.msra.mxu0 %v790
        %1111 = vmatprep.subr.mxu0 %v789
        %1112 = vmatpush1.msra.mxu0 %v788
        %1113 = vmatprep.subr.mxu0 %v787
        %1114 = vmatpush1.msra.mxu0 %v786
        %1115 = vmatprep.subr.mxu0 %v785
        %1116 = vmatpush1.msra.mxu0 %v784
        %1117 = vmatprep.subr.mxu0 %v783
        %1118 = vmatpush1.msra.mxu0 %v782
        %1119 = vmatprep.subr.mxu0 %v781
        %1120 = vmatpush1.msra.mxu0 %v780
        %1121 = vmatprep.subr.mxu0 %v779
        %1122 = vmatpush1.msra.mxu0 %v778
        %1123 = vmatprep.subr.mxu0 %v777
        %1124 = vmatpush1.msra.mxu0 %v776
        %1125 = vmatprep.subr.mxu0 %v775
        %1126 = vmatpush1.msra.mxu0 %v774
        %1127 = vmatprep.subr.mxu0 %v837
        %1128 = vmatpush2.msra.mxu0 %v836
        %1129 = vmatprep.subr.mxu0 %v835
        %1130 = vmatpush2.msra.mxu0 %v834
        %1131 = vmatprep.subr.mxu0 %v833
        %1132 = vmatpush2.msra.mxu0 %v832
        %1133 = vmatprep.subr.mxu0 %v831
        %1134 = vmatpush2.msra.mxu0 %v830
        %1135 = vmatprep.subr.mxu0 %v829
        %1136 = vmatpush2.msra.mxu0 %v828
        %1137 = vmatprep.subr.mxu0 %v827
        %1138 = vmatpush2.msra.mxu0 %v826
        %1139 = vmatprep.subr.mxu0 %v825
        %1140 = vmatpush2.msra.mxu0 %v824
        %1141 = vmatprep.subr.mxu0 %v823
        %1142 = vmatpush2.msra.mxu0 %v822
        %1143 = vmatprep.subr.mxu0 %v821
        %1144 = vmatpush2.msra.mxu0 %v820
        %1145 = vmatprep.subr.mxu0 %v819
        %1146 = vmatpush2.msra.mxu0 %v818
        %1147 = vmatprep.subr.mxu0 %v817
        %1148 = vmatpush2.msra.mxu0 %v816
        %1149 = vmatprep.subr.mxu0 %v815
        %1150 = vmatpush2.msra.mxu0 %v814
        %1151 = vmatprep.subr.mxu0 %v813
        %1152 = vmatpush2.msra.mxu0 %v812
        %1153 = vmatprep.subr.mxu0 %v811
        %1154 = vmatpush2.msra.mxu0 %v810
        %1155 = vmatprep.subr.mxu0 %v809
        %1156 = vmatpush2.msra.mxu0 %v808
        %1157 = vmatprep.subr.mxu0 %v807
        %1158 = vmatpush2.msra.mxu0 %v806
        %1159 = vmatprep.mubr.f32.mxu0 %v585
        %1160 = vmatmul.mubr.f32.gmra.mxu0 %v584
        %v1161 = vpop.f32.mrf.mxu0
        %v1162 = vadd.f32 %v905, %v1161
        %v1163 = vpop.f32.mrf.mxu0
        %v1164 = vadd.f32 %v907, %v1163
        %1165 = vmatprep.mubr.f32.mxu0 %v589
        %1166 = vmatmul.mubr.f32.gmra.mxu0 %v588
        %v1167 = vpop.f32.mrf.mxu0
        %v1168 = vadd.f32 %v911, %v1167
        %v1169 = vpop.f32.mrf.mxu0
        %v1170 = vadd.f32 %v913, %v1169
        %1171 = vmatprep.mubr.f32.mxu0 %v593
        %1172 = vmatmul.mubr.f32.gmra.mxu0 %v592
        %v1173 = vpop.f32.mrf.mxu0
        %v1174 = vadd.f32 %v917, %v1173
        %v1175 = vpop.f32.mrf.mxu0
        %v1176 = vadd.f32 %v919, %v1175
        %1177 = vmatprep.mubr.f32.mxu0 %v597
        %1178 = vmatmul.mubr.f32.gmra.mxu0 %v596
        %v1179 = vpop.f32.mrf.mxu0
        %v1180 = vadd.f32 %v923, %v1179
        %v1181 = vpop.f32.mrf.mxu0
        %v1182 = vadd.f32 %v925, %v1181
        %1183 = vmatprep.mubr.f32.mxu0 %v601
        %1184 = vmatmul.mubr.f32.gmra.mxu0 %v600
        %v1185 = vpop.f32.mrf.mxu0
        %v1186 = vadd.f32 %v929, %v1185
        %v1187 = vpop.f32.mrf.mxu0
        %v1188 = vadd.f32 %v931, %v1187
        %1189 = vmatprep.mubr.f32.mxu0 %v605
        %1190 = vmatmul.mubr.f32.gmra.mxu0 %v604
        %v1191 = vpop.f32.mrf.mxu0
        %v1192 = vadd.f32 %v935, %v1191
        %v1193 = vpop.f32.mrf.mxu0
        %v1194 = vadd.f32 %v937, %v1193
        %1195 = vmatprep.mubr.f32.mxu0 %v609
        %1196 = vmatmul.mubr.f32.gmra.mxu0 %v608
        %v1197 = vpop.f32.mrf.mxu0
        %v1198 = vadd.f32 %v941, %v1197
        %v1199 = vpop.f32.mrf.mxu0
        %v1200 = vadd.f32 %v943, %v1199
        %1201 = vmatprep.mubr.f32.mxu0 %v613
        %1202 = vmatmul.mubr.f32.gmra.mxu0 %v612
        %v1203 = vpop.f32.mrf.mxu0
        %v1204 = vadd.f32 %v947, %v1203
        %v1205 = vpop.f32.mrf.mxu0
        %v1206 = vadd.f32 %v949, %v1205
        %1207 = vmatprep.mubr.f32.mxu0 %v617
        %1208 = vmatmul.mubr.f32.gmra.mxu0 %v616
        %v1209 = vpop.f32.mrf.mxu0
        %v1210 = vadd.f32 %v953, %v1209
        %v1211 = vpop.f32.mrf.mxu0
        %v1212 = vadd.f32 %v955, %v1211
        %1213 = vmatprep.mubr.f32.mxu0 %v621
        %1214 = vmatmul.mubr.f32.gmra.mxu0 %v620
        %v1215 = vpop.f32.mrf.mxu0
        %v1216 = vadd.f32 %v959, %v1215
        %v1217 = vpop.f32.mrf.mxu0
        %v1218 = vadd.f32 %v961, %v1217
        %1219 = vmatprep.mubr.f32.mxu0 %v625
        %1220 = vmatmul.mubr.f32.gmra.mxu0 %v624
        %v1221 = vpop.f32.mrf.mxu0
        %v1222 = vadd.f32 %v965, %v1221
        %v1223 = vpop.f32.mrf.mxu0
        %v1224 = vadd.f32 %v967, %v1223
        %1225 = vmatprep.mubr.f32.mxu0 %v629
        %1226 = vmatmul.mubr.f32.gmra.mxu0 %v628
        %v1227 = vpop.f32.mrf.mxu0
        %v1228 = vadd.f32 %v971, %v1227
        %v1229 = vpop.f32.mrf.mxu0
        %v1230 = vadd.f32 %v973, %v1229
        %1231 = vmatprep.mubr.f32.mxu0 %v633
        %1232 = vmatmul.mubr.f32.gmra.mxu0 %v632
        %v1233 = vpop.f32.mrf.mxu0
        %v1234 = vadd.f32 %v977, %v1233
        %v1235 = vpop.f32.mrf.mxu0
        %v1236 = vadd.f32 %v979, %v1235
        %1237 = vmatprep.mubr.f32.mxu0 %v637
        %1238 = vmatmul.mubr.f32.gmra.mxu0 %v636
        %v1239 = vpop.f32.mrf.mxu0
        %v1240 = vadd.f32 %v983, %v1239
        %v1241 = vpop.f32.mrf.mxu0
        %v1242 = vadd.f32 %v985, %v1241
        %1243 = vmatprep.mubr.f32.mxu0 %v641
        %1244 = vmatmul.mubr.f32.gmra.mxu0 %v640
        %v1245 = vpop.f32.mrf.mxu0
        %v1246 = vadd.f32 %v989, %v1245
        %v1247 = vpop.f32.mrf.mxu0
        %v1248 = vadd.f32 %v991, %v1247
        %1249 = vmatprep.mubr.f32.mxu0 %v645
        %1250 = vmatmul.mubr.f32.gmra.mxu0 %v644
        %v1251 = vpop.f32.mrf.mxu0
        %v1252 = vadd.f32 %v995, %v1251
        %v1253 = vpop.f32.mrf.mxu0
        %v1254 = vadd.f32 %v997, %v1253
        %1255 = vmatprep.mubr.f32.mxu0 %v649
        %1256 = vmatmul.mubr.f32.gmra.mxu0 %v648
        %v1257 = vpop.f32.mrf.mxu0
        %v1258 = vadd.f32 %v1001, %v1257
        %v1259 = vpop.f32.mrf.mxu0
        %v1260 = vadd.f32 %v1003, %v1259
        %1261 = vmatprep.mubr.f32.mxu0 %v653
        %1262 = vmatmul.mubr.f32.gmra.mxu0 %v652
        %v1263 = vpop.f32.mrf.mxu0
        %v1264 = vadd.f32 %v1007, %v1263
        %v1265 = vpop.f32.mrf.mxu0
        %v1266 = vadd.f32 %v1009, %v1265
        %1267 = vmatprep.mubr.f32.mxu0 %v657
        %1268 = vmatmul.mubr.f32.gmra.mxu0 %v656
        %v1269 = vpop.f32.mrf.mxu0
        %v1270 = vadd.f32 %v1013, %v1269
        %v1271 = vpop.f32.mrf.mxu0
        %v1272 = vadd.f32 %v1015, %v1271
        %1273 = vmatprep.mubr.f32.mxu0 %v661
        %1274 = vmatmul.mubr.f32.gmra.mxu0 %v660
        %v1275 = vpop.f32.mrf.mxu0
        %v1276 = vadd.f32 %v1019, %v1275
        %v1277 = vpop.f32.mrf.mxu0
        %v1278 = vadd.f32 %v1021, %v1277
        %1279 = vmatprep.mubr.f32.mxu0 %v665
        %1280 = vmatmul.mubr.f32.gmra.mxu0 %v664
        %v1281 = vpop.f32.mrf.mxu0
        %v1282 = vadd.f32 %v1025, %v1281
        %v1283 = vpop.f32.mrf.mxu0
        %v1284 = vadd.f32 %v1027, %v1283
        %1285 = vmatprep.mubr.f32.mxu0 %v669
        %1286 = vmatmul.mubr.f32.gmra.mxu0 %v668
        %v1287 = vpop.f32.mrf.mxu0
        %v1288 = vadd.f32 %v1031, %v1287
        %v1289 = vpop.f32.mrf.mxu0
        %v1290 = vadd.f32 %v1033, %v1289
        %1291 = vmatprep.mubr.f32.mxu0 %v673
        %1292 = vmatmul.mubr.f32.gmra.mxu0 %v672
        %v1293 = vpop.f32.mrf.mxu0
        %v1294 = vadd.f32 %v1037, %v1293
        %v1295 = vpop.f32.mrf.mxu0
        %v1296 = vadd.f32 %v1039, %v1295
        %1297 = vmatprep.mubr.f32.mxu0 %v677
        %1298 = vmatmul.mubr.f32.gmra.mxu0 %v676
        %v1299 = vpop.f32.mrf.mxu0
        %v1300 = vadd.f32 %v1043, %v1299
        %v1301 = vpop.f32.mrf.mxu0
        %v1302 = vadd.f32 %v1045, %v1301
        %1303 = vmatprep.mubr.f32.mxu0 %v681
        %1304 = vmatmul.mubr.f32.gmra.mxu0 %v680
        %v1305 = vpop.f32.mrf.mxu0
        %v1306 = vadd.f32 %v1049, %v1305
        %v1307 = vpop.f32.mrf.mxu0
        %v1308 = vadd.f32 %v1051, %v1307
        %1309 = vmatprep.mubr.f32.mxu0 %v685
        %1310 = vmatmul.mubr.f32.gmra.mxu0 %v684
        %v1311 = vpop.f32.mrf.mxu0
        %v1312 = vadd.f32 %v1055, %v1311
        %v1313 = vpop.f32.mrf.mxu0
        %v1314 = vadd.f32 %v1057, %v1313
        %1315 = vmatprep.mubr.f32.mxu0 %v689
        %1316 = vmatmul.mubr.f32.gmra.mxu0 %v688
        %v1317 = vpop.f32.mrf.mxu0
        %v1318 = vadd.f32 %v1061, %v1317
        %v1319 = vpop.f32.mrf.mxu0
        %v1320 = vadd.f32 %v1063, %v1319
        %1321 = vmatprep.mubr.f32.mxu0 %v693
        %1322 = vmatmul.mubr.f32.gmra.mxu0 %v692
        %v1323 = vpop.f32.mrf.mxu0
        %v1324 = vadd.f32 %v1067, %v1323
        %v1325 = vpop.f32.mrf.mxu0
        %v1326 = vadd.f32 %v1069, %v1325
        %1327 = vmatprep.mubr.f32.mxu0 %v697
        %1328 = vmatmul.mubr.f32.gmra.mxu0 %v696
        %v1329 = vpop.f32.mrf.mxu0
        %v1330 = vadd.f32 %v1073, %v1329
        %v1331 = vpop.f32.mrf.mxu0
        %v1332 = vadd.f32 %v1075, %v1331
        %1333 = vmatprep.mubr.f32.mxu0 %v701
        %1334 = vmatmul.mubr.f32.gmra.mxu0 %v700
        %v1335 = vpop.f32.mrf.mxu0
        %v1336 = vadd.f32 %v1079, %v1335
        %v1337 = vpop.f32.mrf.mxu0
        %v1338 = vadd.f32 %v1081, %v1337
        %1339 = vmatprep.mubr.f32.mxu0 %v705
        %1340 = vmatmul.mubr.f32.gmra.mxu0 %v704
        %v1341 = vpop.f32.mrf.mxu0
        %v1342 = vadd.f32 %v1085, %v1341
        %v1343 = vpop.f32.mrf.mxu0
        %v1344 = vadd.f32 %v1087, %v1343
        %1345 = vmatprep.mubr.f32.mxu0 %v709
        %1346 = vmatmul.mubr.f32.gmra.mxu0 %v708
        %v1347 = vpop.f32.mrf.mxu0
        %v1348 = vadd.f32 %v1091, %v1347
        %v1349 = vpop.f32.mrf.mxu0
        %v1350 = vadd.f32 %v1093, %v1349
        %1351 = vdwg.mxu0
        %v1352 = vadd.f32 %v518, %v1162
        %v1353 = vadd.f32 %v519, %v1164
        %v1354 = vadd.f32 %v520, %v1168
        %v1355 = vadd.f32 %v521, %v1170
        %v1356 = vadd.f32 %v522, %v1174
        %v1357 = vadd.f32 %v523, %v1176
        %v1358 = vadd.f32 %v524, %v1180
        %v1359 = vadd.f32 %v525, %v1182
        %v1360 = vadd.f32 %v526, %v1186
        %v1361 = vadd.f32 %v527, %v1188
        %v1362 = vadd.f32 %v528, %v1192
        %v1363 = vadd.f32 %v529, %v1194
        %v1364 = vadd.f32 %v530, %v1198
        %v1365 = vadd.f32 %v531, %v1200
        %v1366 = vadd.f32 %v532, %v1204
        %v1367 = vadd.f32 %v533, %v1206
        %v1368 = vadd.f32 %v534, %v1210
        %v1369 = vadd.f32 %v535, %v1212
        %v1370 = vadd.f32 %v536, %v1216
        %v1371 = vadd.f32 %v537, %v1218
        %v1372 = vadd.f32 %v538, %v1222
        %v1373 = vadd.f32 %v539, %v1224
        %v1374 = vadd.f32 %v540, %v1228
        %v1375 = vadd.f32 %v541, %v1230
        %v1376 = vadd.f32 %v542, %v1234
        %v1377 = vadd.f32 %v543, %v1236
        %v1378 = vadd.f32 %v544, %v1240
        %v1379 = vadd.f32 %v545, %v1242
        %v1380 = vadd.f32 %v546, %v1246
        %v1381 = vadd.f32 %v547, %v1248
        %v1382 = vadd.f32 %v548, %v1252
        %v1383 = vadd.f32 %v549, %v1254
        %v1384 = vadd.f32 %v550, %v1258
        %v1385 = vadd.f32 %v551, %v1260
        %v1386 = vadd.f32 %v552, %v1264
        %v1387 = vadd.f32 %v553, %v1266
        %v1388 = vadd.f32 %v554, %v1270
        %v1389 = vadd.f32 %v555, %v1272
        %v1390 = vadd.f32 %v556, %v1276
        %v1391 = vadd.f32 %v557, %v1278
        %v1392 = vadd.f32 %v558, %v1282
        %v1393 = vadd.f32 %v559, %v1284
        %v1394 = vadd.f32 %v560, %v1288
        %v1395 = vadd.f32 %v561, %v1290
        %v1396 = vadd.f32 %v562, %v1294
        %v1397 = vadd.f32 %v563, %v1296
        %v1398 = vadd.f32 %v564, %v1300
        %v1399 = vadd.f32 %v565, %v1302
        %v1400 = vadd.f32 %v566, %v1306
        %v1401 = vadd.f32 %v567, %v1308
        %v1402 = vadd.f32 %v568, %v1312
        %v1403 = vadd.f32 %v569, %v1314
        %v1404 = vadd.f32 %v570, %v1318
        %v1405 = vadd.f32 %v571, %v1320
        %v1406 = vadd.f32 %v572, %v1324
        %v1407 = vadd.f32 %v573, %v1326
        %v1408 = vadd.f32 %v574, %v1330
        %v1409 = vadd.f32 %v575, %v1332
        %v1410 = vadd.f32 %v576, %v1336
        %v1411 = vadd.f32 %v577, %v1338
        %v1412 = vadd.f32 %v578, %v1342
        %v1413 = vadd.f32 %v579, %v1344
        %v1414 = vadd.f32 %v580, %v1348
        %v1415 = vadd.f32 %v581, %v1350
        %1416 = vst [vmem:[#allocation2] sm:$0xff] %v1352
        %1417 = vst [vmem:[#allocation2 + $0x8] sm:$0xff] %v1353
        %1418 = vst [vmem:[#allocation2 + $0x10] sm:$0xff] %v1354
        %1419 = vst [vmem:[#allocation2 + $0x18] sm:$0xff] %v1355
        %1420 = vst [vmem:[#allocation2 + $0x20] sm:$0xff] %v1356
        %1421 = vst [vmem:[#allocation2 + $0x28] sm:$0xff] %v1357
        %1422 = vst [vmem:[#allocation2 + $0x30] sm:$0xff] %v1358
        %1423 = vst [vmem:[#allocation2 + $0x38] sm:$0xff] %v1359
        %1424 = vst [vmem:[#allocation2 + $0x40] sm:$0xff] %v1360
        %1425 = vst [vmem:[#allocation2 + $0x48] sm:$0xff] %v1361
        %1426 = vst [vmem:[#allocation2 + $0x50] sm:$0xff] %v1362
        %1427 = vst [vmem:[#allocation2 + $0x58] sm:$0xff] %v1363
        %1428 = vst [vmem:[#allocation2 + $0x60] sm:$0xff] %v1364
        %1429 = vst [vmem:[#allocation2 + $0x68] sm:$0xff] %v1365
        %1430 = vst [vmem:[#allocation2 + $0x70] sm:$0xff] %v1366
        %1431 = vst [vmem:[#allocation2 + $0x78] sm:$0xff] %v1367
        %1432 = vst [vmem:[#allocation2 + $0x80] sm:$0xff] %v1368
        %1433 = vst [vmem:[#allocation2 + $0x88] sm:$0xff] %v1369
        %1434 = vst [vmem:[#allocation2 + $0x90] sm:$0xff] %v1370
        %1435 = vst [vmem:[#allocation2 + $0x98] sm:$0xff] %v1371
        %1436 = vst [vmem:[#allocation2 + $0xa0] sm:$0xff] %v1372
        %1437 = vst [vmem:[#allocation2 + $0xa8] sm:$0xff] %v1373
        %1438 = vst [vmem:[#allocation2 + $0xb0] sm:$0xff] %v1374
        %1439 = vst [vmem:[#allocation2 + $0xb8] sm:$0xff] %v1375
        %1440 = vst [vmem:[#allocation2 + $0xc0] sm:$0xff] %v1376
        %1441 = vst [vmem:[#allocation2 + $0xc8] sm:$0xff] %v1377
        %1442 = vst [vmem:[#allocation2 + $0xd0] sm:$0xff] %v1378
        %1443 = vst [vmem:[#allocation2 + $0xd8] sm:$0xff] %v1379
        %1444 = vst [vmem:[#allocation2 + $0xe0] sm:$0xff] %v1380
        %1445 = vst [vmem:[#allocation2 + $0xe8] sm:$0xff] %v1381
        %1446 = vst [vmem:[#allocation2 + $0xf0] sm:$0xff] %v1382
        %1447 = vst [vmem:[#allocation2 + $0xf8] sm:$0xff] %v1383
        %1448 = vst [vmem:[#allocation2 + $0x100] sm:$0xff] %v1384
        %1449 = vst [vmem:[#allocation2 + $0x108] sm:$0xff] %v1385
        %1450 = vst [vmem:[#allocation2 + $0x110] sm:$0xff] %v1386
        %1451 = vst [vmem:[#allocation2 + $0x118] sm:$0xff] %v1387
        %1452 = vst [vmem:[#allocation2 + $0x120] sm:$0xff] %v1388
        %1453 = vst [vmem:[#allocation2 + $0x128] sm:$0xff] %v1389
        %1454 = vst [vmem:[#allocation2 + $0x130] sm:$0xff] %v1390
        %1455 = vst [vmem:[#allocation2 + $0x138] sm:$0xff] %v1391
        %1456 = vst [vmem:[#allocation2 + $0x140] sm:$0xff] %v1392
        %1457 = vst [vmem:[#allocation2 + $0x148] sm:$0xff] %v1393
        %1458 = vst [vmem:[#allocation2 + $0x150] sm:$0xff] %v1394
        %1459 = vst [vmem:[#allocation2 + $0x158] sm:$0xff] %v1395
        %1460 = vst [vmem:[#allocation2 + $0x160] sm:$0xff] %v1396
        %1461 = vst [vmem:[#allocation2 + $0x168] sm:$0xff] %v1397
        %1462 = vst [vmem:[#allocation2 + $0x170] sm:$0xff] %v1398
        %1463 = vst [vmem:[#allocation2 + $0x178] sm:$0xff] %v1399
        %1464 = vst [vmem:[#allocation2 + $0x180] sm:$0xff] %v1400
        %1465 = vst [vmem:[#allocation2 + $0x188] sm:$0xff] %v1401
        %1466 = vst [vmem:[#allocation2 + $0x190] sm:$0xff] %v1402
        %1467 = vst [vmem:[#allocation2 + $0x198] sm:$0xff] %v1403
        %1468 = vst [vmem:[#allocation2 + $0x1a0] sm:$0xff] %v1404
        %1469 = vst [vmem:[#allocation2 + $0x1a8] sm:$0xff] %v1405
        %1470 = vst [vmem:[#allocation2 + $0x1b0] sm:$0xff] %v1406
        %1471 = vst [vmem:[#allocation2 + $0x1b8] sm:$0xff] %v1407
        %1472 = vst [vmem:[#allocation2 + $0x1c0] sm:$0xff] %v1408
        %1473 = vst [vmem:[#allocation2 + $0x1c8] sm:$0xff] %v1409
        %1474 = vst [vmem:[#allocation2 + $0x1d0] sm:$0xff] %v1410
        %1475 = vst [vmem:[#allocation2 + $0x1d8] sm:$0xff] %v1411
        %1476 = vst [vmem:[#allocation2 + $0x1e0] sm:$0xff] %v1412
        %1477 = vst [vmem:[#allocation2 + $0x1e8] sm:$0xff] %v1413
        %1478 = vst [vmem:[#allocation2 + $0x1f0] sm:$0xff] %v1414
        %1479 = vst [vmem:[#allocation2 + $0x1f8] sm:$0xff] %v1415
        %p1480 = scmp.eq.s32.totalorder %s36, 1
        // Predicated region
        $region81: #{tpu_custom_call.1} parent=47 // pred_check
          %p1481 = pneg %p1480
        $region82: #{tpu_custom_call.1} parent=47 // pred_check_branch
          %1483 = sbr.rel (%p1481) target = $region84
        $region83: #{tpu_custom_call.1} parent=47 // pred_region
          %v1484 = vld [vmem:[#allocation2] sm:$0xff]
          %v1485 = vld [vmem:[#allocation2 + $0x8] sm:$0xff]
          %v1486 = vld [vmem:[#allocation2 + $0x10] sm:$0xff]
          %v1487 = vld [vmem:[#allocation2 + $0x18] sm:$0xff]
          %v1488 = vld [vmem:[#allocation2 + $0x20] sm:$0xff]
          %v1489 = vld [vmem:[#allocation2 + $0x28] sm:$0xff]
          %v1490 = vld [vmem:[#allocation2 + $0x30] sm:$0xff]
          %v1491 = vld [vmem:[#allocation2 + $0x38] sm:$0xff]
          %v1492 = vld [vmem:[#allocation2 + $0x40] sm:$0xff]
          %v1493 = vld [vmem:[#allocation2 + $0x48] sm:$0xff]
          %v1494 = vld [vmem:[#allocation2 + $0x50] sm:$0xff]
          %v1495 = vld [vmem:[#allocation2 + $0x58] sm:$0xff]
          %v1496 = vld [vmem:[#allocation2 + $0x60] sm:$0xff]
          %v1497 = vld [vmem:[#allocation2 + $0x68] sm:$0xff]
          %v1498 = vld [vmem:[#allocation2 + $0x70] sm:$0xff]
          %v1499 = vld [vmem:[#allocation2 + $0x78] sm:$0xff]
          %v1500 = vld [vmem:[#allocation2 + $0x80] sm:$0xff]
          %v1501 = vld [vmem:[#allocation2 + $0x88] sm:$0xff]
          %v1502 = vld [vmem:[#allocation2 + $0x90] sm:$0xff]
          %v1503 = vld [vmem:[#allocation2 + $0x98] sm:$0xff]
          %v1504 = vld [vmem:[#allocation2 + $0xa0] sm:$0xff]
          %v1505 = vld [vmem:[#allocation2 + $0xa8] sm:$0xff]
          %v1506 = vld [vmem:[#allocation2 + $0xb0] sm:$0xff]
          %v1507 = vld [vmem:[#allocation2 + $0xb8] sm:$0xff]
          %v1508 = vld [vmem:[#allocation2 + $0xc0] sm:$0xff]
          %v1509 = vld [vmem:[#allocation2 + $0xc8] sm:$0xff]
          %v1510 = vld [vmem:[#allocation2 + $0xd0] sm:$0xff]
          %v1511 = vld [vmem:[#allocation2 + $0xd8] sm:$0xff]
          %v1512 = vld [vmem:[#allocation2 + $0xe0] sm:$0xff]
          %v1513 = vld [vmem:[#allocation2 + $0xe8] sm:$0xff]
          %v1514 = vld [vmem:[#allocation2 + $0xf0] sm:$0xff]
          %v1515 = vld [vmem:[#allocation2 + $0xf8] sm:$0xff]
          %v1516 = vld [vmem:[#allocation2 + $0x100] sm:$0xff]
          %v1517 = vld [vmem:[#allocation2 + $0x108] sm:$0xff]
          %v1518 = vld [vmem:[#allocation2 + $0x110] sm:$0xff]
          %v1519 = vld [vmem:[#allocation2 + $0x118] sm:$0xff]
          %v1520 = vld [vmem:[#allocation2 + $0x120] sm:$0xff]
          %v1521 = vld [vmem:[#allocation2 + $0x128] sm:$0xff]
          %v1522 = vld [vmem:[#allocation2 + $0x130] sm:$0xff]
          %v1523 = vld [vmem:[#allocation2 + $0x138] sm:$0xff]
          %v1524 = vld [vmem:[#allocation2 + $0x140] sm:$0xff]
          %v1525 = vld [vmem:[#allocation2 + $0x148] sm:$0xff]
          %v1526 = vld [vmem:[#allocation2 + $0x150] sm:$0xff]
          %v1527 = vld [vmem:[#allocation2 + $0x158] sm:$0xff]
          %v1528 = vld [vmem:[#allocation2 + $0x160] sm:$0xff]
          %v1529 = vld [vmem:[#allocation2 + $0x168] sm:$0xff]
          %v1530 = vld [vmem:[#allocation2 + $0x170] sm:$0xff]
          %v1531 = vld [vmem:[#allocation2 + $0x178] sm:$0xff]
          %v1532 = vld [vmem:[#allocation2 + $0x180] sm:$0xff]
          %v1533 = vld [vmem:[#allocation2 + $0x188] sm:$0xff]
          %v1534 = vld [vmem:[#allocation2 + $0x190] sm:$0xff]
          %v1535 = vld [vmem:[#allocation2 + $0x198] sm:$0xff]
          %v1536 = vld [vmem:[#allocation2 + $0x1a0] sm:$0xff]
          %v1537 = vld [vmem:[#allocation2 + $0x1a8] sm:$0xff]
          %v1538 = vld [vmem:[#allocation2 + $0x1b0] sm:$0xff]
          %v1539 = vld [vmem:[#allocation2 + $0x1b8] sm:$0xff]
          %v1540 = vld [vmem:[#allocation2 + $0x1c0] sm:$0xff]
          %v1541 = vld [vmem:[#allocation2 + $0x1c8] sm:$0xff]
          %v1542 = vld [vmem:[#allocation2 + $0x1d0] sm:$0xff]
          %v1543 = vld [vmem:[#allocation2 + $0x1d8] sm:$0xff]
          %v1544 = vld [vmem:[#allocation2 + $0x1e0] sm:$0xff]
          %v1545 = vld [vmem:[#allocation2 + $0x1e8] sm:$0xff]
          %v1546 = vld [vmem:[#allocation2 + $0x1f0] sm:$0xff]
          %v1547 = vld [vmem:[#allocation2 + $0x1f8] sm:$0xff]
          %v1548 = vld [vmem:[#allocation8] sm:$0x3]
          %v1550 = vlaneseq
          %v1551 = vshrl.u32 %v1550, 7
          %v1552 = vsub.s32 0, %v1551
          %v1553 = vrot.slane %v1548, %v1552
          %v1554 = vlaneseq
          %v1555 = vshrl.u32 %v1554, 7
          %v1556 = vsub.s32 1, %v1555
          %v1557 = vrot.slane %v1548, %v1556
          %v1560 = vadd.f32 %v1484, %v1553
          %v1561 = vadd.f32 %v1485, %v1557
          %v1562 = vadd.f32 %v1486, %v1553
          %v1563 = vadd.f32 %v1487, %v1557
          %v1564 = vadd.f32 %v1488, %v1553
          %v1565 = vadd.f32 %v1489, %v1557
          %v1566 = vadd.f32 %v1490, %v1553
          %v1567 = vadd.f32 %v1491, %v1557
          %v1568 = vadd.f32 %v1492, %v1553
          %v1569 = vadd.f32 %v1493, %v1557
          %v1570 = vadd.f32 %v1494, %v1553
          %v1571 = vadd.f32 %v1495, %v1557
          %v1572 = vadd.f32 %v1496, %v1553
          %v1573 = vadd.f32 %v1497, %v1557
          %v1574 = vadd.f32 %v1498, %v1553
          %v1575 = vadd.f32 %v1499, %v1557
          %v1576 = vadd.f32 %v1500, %v1553
          %v1577 = vadd.f32 %v1501, %v1557
          %v1578 = vadd.f32 %v1502, %v1553
          %v1579 = vadd.f32 %v1503, %v1557
          %v1580 = vadd.f32 %v1504, %v1553
          %v1581 = vadd.f32 %v1505, %v1557
          %v1582 = vadd.f32 %v1506, %v1553
          %v1583 = vadd.f32 %v1507, %v1557
          %v1584 = vadd.f32 %v1508, %v1553
          %v1585 = vadd.f32 %v1509, %v1557
          %v1586 = vadd.f32 %v1510, %v1553
          %v1587 = vadd.f32 %v1511, %v1557
          %v1588 = vadd.f32 %v1512, %v1553
          %v1589 = vadd.f32 %v1513, %v1557
          %v1590 = vadd.f32 %v1514, %v1553
          %v1591 = vadd.f32 %v1515, %v1557
          %v1592 = vadd.f32 %v1516, %v1553
          %v1593 = vadd.f32 %v1517, %v1557
          %v1594 = vadd.f32 %v1518, %v1553
          %v1595 = vadd.f32 %v1519, %v1557
          %v1596 = vadd.f32 %v1520, %v1553
          %v1597 = vadd.f32 %v1521, %v1557
          %v1598 = vadd.f32 %v1522, %v1553
          %v1599 = vadd.f32 %v1523, %v1557
          %v1600 = vadd.f32 %v1524, %v1553
          %v1601 = vadd.f32 %v1525, %v1557
          %v1602 = vadd.f32 %v1526, %v1553
          %v1603 = vadd.f32 %v1527, %v1557
          %v1604 = vadd.f32 %v1528, %v1553
          %v1605 = vadd.f32 %v1529, %v1557
          %v1606 = vadd.f32 %v1530, %v1553
          %v1607 = vadd.f32 %v1531, %v1557
          %v1608 = vadd.f32 %v1532, %v1553
          %v1609 = vadd.f32 %v1533, %v1557
          %v1610 = vadd.f32 %v1534, %v1553
          %v1611 = vadd.f32 %v1535, %v1557
          %v1612 = vadd.f32 %v1536, %v1553
          %v1613 = vadd.f32 %v1537, %v1557
          %v1614 = vadd.f32 %v1538, %v1553
          %v1615 = vadd.f32 %v1539, %v1557
          %v1616 = vadd.f32 %v1540, %v1553
          %v1617 = vadd.f32 %v1541, %v1557
          %v1618 = vadd.f32 %v1542, %v1553
          %v1619 = vadd.f32 %v1543, %v1557
          %v1620 = vadd.f32 %v1544, %v1553
          %v1621 = vadd.f32 %v1545, %v1557
          %v1622 = vadd.f32 %v1546, %v1553
          %v1623 = vadd.f32 %v1547, %v1557
          %v1624 = vld [vmem:[%s392] sm:$0xff]
          %v1625 = vld [vmem:[%s392 + $0x8] sm:$0xff]
          %v1626 = vld [vmem:[%s392 + $0x10] sm:$0xff]
          %v1627 = vld [vmem:[%s392 + $0x18] sm:$0xff]
          %v1628 = vld [vmem:[%s392 + $0x20] sm:$0xff]
          %v1629 = vld [vmem:[%s392 + $0x28] sm:$0xff]
          %v1630 = vld [vmem:[%s392 + $0x30] sm:$0xff]
          %v1631 = vld [vmem:[%s392 + $0x38] sm:$0xff]
          %v1632 = vld [vmem:[%s392 + $0x40] sm:$0xff]
          %v1633 = vld [vmem:[%s392 + $0x48] sm:$0xff]
          %v1634 = vld [vmem:[%s392 + $0x50] sm:$0xff]
          %v1635 = vld [vmem:[%s392 + $0x58] sm:$0xff]
          %v1636 = vld [vmem:[%s392 + $0x60] sm:$0xff]
          %v1637 = vld [vmem:[%s392 + $0x68] sm:$0xff]
          %v1638 = vld [vmem:[%s392 + $0x70] sm:$0xff]
          %v1639 = vld [vmem:[%s392 + $0x78] sm:$0xff]
          %v1640 = vld [vmem:[%s392 + $0x80] sm:$0xff]
          %v1641 = vld [vmem:[%s392 + $0x88] sm:$0xff]
          %v1642 = vld [vmem:[%s392 + $0x90] sm:$0xff]
          %v1643 = vld [vmem:[%s392 + $0x98] sm:$0xff]
          %v1644 = vld [vmem:[%s392 + $0xa0] sm:$0xff]
          %v1645 = vld [vmem:[%s392 + $0xa8] sm:$0xff]
          %v1646 = vld [vmem:[%s392 + $0xb0] sm:$0xff]
          %v1647 = vld [vmem:[%s392 + $0xb8] sm:$0xff]
          %v1648 = vld [vmem:[%s392 + $0xc0] sm:$0xff]
          %v1649 = vld [vmem:[%s392 + $0xc8] sm:$0xff]
          %v1650 = vld [vmem:[%s392 + $0xd0] sm:$0xff]
          %v1651 = vld [vmem:[%s392 + $0xd8] sm:$0xff]
          %v1652 = vld [vmem:[%s392 + $0xe0] sm:$0xff]
          %v1653 = vld [vmem:[%s392 + $0xe8] sm:$0xff]
          %v1654 = vld [vmem:[%s392 + $0xf0] sm:$0xff]
          %v1655 = vld [vmem:[%s392 + $0xf8] sm:$0xff]
          %v1656 = vld [vmem:[%s392 + $0x100] sm:$0xff]
          %v1657 = vld [vmem:[%s392 + $0x108] sm:$0xff]
          %v1658 = vld [vmem:[%s392 + $0x110] sm:$0xff]
          %v1659 = vld [vmem:[%s392 + $0x118] sm:$0xff]
          %v1660 = vld [vmem:[%s392 + $0x120] sm:$0xff]
          %v1661 = vld [vmem:[%s392 + $0x128] sm:$0xff]
          %v1662 = vld [vmem:[%s392 + $0x130] sm:$0xff]
          %v1663 = vld [vmem:[%s392 + $0x138] sm:$0xff]
          %v1664 = vld [vmem:[%s392 + $0x140] sm:$0xff]
          %v1665 = vld [vmem:[%s392 + $0x148] sm:$0xff]
          %v1666 = vld [vmem:[%s392 + $0x150] sm:$0xff]
          %v1667 = vld [vmem:[%s392 + $0x158] sm:$0xff]
          %v1668 = vld [vmem:[%s392 + $0x160] sm:$0xff]
          %v1669 = vld [vmem:[%s392 + $0x168] sm:$0xff]
          %v1670 = vld [vmem:[%s392 + $0x170] sm:$0xff]
          %v1671 = vld [vmem:[%s392 + $0x178] sm:$0xff]
          %v1672 = vld [vmem:[%s392 + $0x180] sm:$0xff]
          %v1673 = vld [vmem:[%s392 + $0x188] sm:$0xff]
          %v1674 = vld [vmem:[%s392 + $0x190] sm:$0xff]
          %v1675 = vld [vmem:[%s392 + $0x198] sm:$0xff]
          %v1676 = vld [vmem:[%s392 + $0x1a0] sm:$0xff]
          %v1677 = vld [vmem:[%s392 + $0x1a8] sm:$0xff]
          %v1678 = vld [vmem:[%s392 + $0x1b0] sm:$0xff]
          %v1679 = vld [vmem:[%s392 + $0x1b8] sm:$0xff]
          %v1680 = vld [vmem:[%s392 + $0x1c0] sm:$0xff]
          %v1681 = vld [vmem:[%s392 + $0x1c8] sm:$0xff]
          %v1682 = vld [vmem:[%s392 + $0x1d0] sm:$0xff]
          %v1683 = vld [vmem:[%s392 + $0x1d8] sm:$0xff]
          %v1684 = vld [vmem:[%s392 + $0x1e0] sm:$0xff]
          %v1685 = vld [vmem:[%s392 + $0x1e8] sm:$0xff]
          %v1686 = vld [vmem:[%s392 + $0x1f0] sm:$0xff]
          %v1687 = vld [vmem:[%s392 + $0x1f8] sm:$0xff]
          %v1688 = vadd.f32 %v1560, %v1624
          %v1689 = vadd.f32 %v1561, %v1625
          %v1690 = vadd.f32 %v1562, %v1626
          %v1691 = vadd.f32 %v1563, %v1627
          %v1692 = vadd.f32 %v1564, %v1628
          %v1693 = vadd.f32 %v1565, %v1629
          %v1694 = vadd.f32 %v1566, %v1630
          %v1695 = vadd.f32 %v1567, %v1631
          %v1696 = vadd.f32 %v1568, %v1632
          %v1697 = vadd.f32 %v1569, %v1633
          %v1698 = vadd.f32 %v1570, %v1634
          %v1699 = vadd.f32 %v1571, %v1635
          %v1700 = vadd.f32 %v1572, %v1636
          %v1701 = vadd.f32 %v1573, %v1637
          %v1702 = vadd.f32 %v1574, %v1638
          %v1703 = vadd.f32 %v1575, %v1639
          %v1704 = vadd.f32 %v1576, %v1640
          %v1705 = vadd.f32 %v1577, %v1641
          %v1706 = vadd.f32 %v1578, %v1642
          %v1707 = vadd.f32 %v1579, %v1643
          %v1708 = vadd.f32 %v1580, %v1644
          %v1709 = vadd.f32 %v1581, %v1645
          %v1710 = vadd.f32 %v1582, %v1646
          %v1711 = vadd.f32 %v1583, %v1647
          %v1712 = vadd.f32 %v1584, %v1648
          %v1713 = vadd.f32 %v1585, %v1649
          %v1714 = vadd.f32 %v1586, %v1650
          %v1715 = vadd.f32 %v1587, %v1651
          %v1716 = vadd.f32 %v1588, %v1652
          %v1717 = vadd.f32 %v1589, %v1653
          %v1718 = vadd.f32 %v1590, %v1654
          %v1719 = vadd.f32 %v1591, %v1655
          %v1720 = vadd.f32 %v1592, %v1656
          %v1721 = vadd.f32 %v1593, %v1657
          %v1722 = vadd.f32 %v1594, %v1658
          %v1723 = vadd.f32 %v1595, %v1659
          %v1724 = vadd.f32 %v1596, %v1660
          %v1725 = vadd.f32 %v1597, %v1661
          %v1726 = vadd.f32 %v1598, %v1662
          %v1727 = vadd.f32 %v1599, %v1663
          %v1728 = vadd.f32 %v1600, %v1664
          %v1729 = vadd.f32 %v1601, %v1665
          %v1730 = vadd.f32 %v1602, %v1666
          %v1731 = vadd.f32 %v1603, %v1667
          %v1732 = vadd.f32 %v1604, %v1668
          %v1733 = vadd.f32 %v1605, %v1669
          %v1734 = vadd.f32 %v1606, %v1670
          %v1735 = vadd.f32 %v1607, %v1671
          %v1736 = vadd.f32 %v1608, %v1672
          %v1737 = vadd.f32 %v1609, %v1673
          %v1738 = vadd.f32 %v1610, %v1674
          %v1739 = vadd.f32 %v1611, %v1675
          %v1740 = vadd.f32 %v1612, %v1676
          %v1741 = vadd.f32 %v1613, %v1677
          %v1742 = vadd.f32 %v1614, %v1678
          %v1743 = vadd.f32 %v1615, %v1679
          %v1744 = vadd.f32 %v1616, %v1680
          %v1745 = vadd.f32 %v1617, %v1681
          %v1746 = vadd.f32 %v1618, %v1682
          %v1747 = vadd.f32 %v1619, %v1683
          %v1748 = vadd.f32 %v1620, %v1684
          %v1749 = vadd.f32 %v1621, %v1685
          %v1750 = vadd.f32 %v1622, %v1686
          %v1751 = vadd.f32 %v1623, %v1687
          %v1752 = vadd.f32 %v1688, %v1689
          %1753 = vadd.xlane.f32.xlu0 %v1752
          %v1754 = vpop.xlane.xlu0 %1753
          %v1755 = vadd.f32 %v1690, %v1691
          %1756 = vadd.xlane.f32.xlu0 %v1755
          %v1757 = vpop.xlane.xlu0 %1756
          %v1758 = vadd.f32 %v1692, %v1693
          %1759 = vadd.xlane.f32.xlu0 %v1758
          %v1760 = vpop.xlane.xlu0 %1759
          %v1761 = vadd.f32 %v1694, %v1695
          %1762 = vadd.xlane.f32.xlu0 %v1761
          %v1763 = vpop.xlane.xlu0 %1762
          %v1764 = vadd.f32 %v1696, %v1697
          %1765 = vadd.xlane.f32.xlu0 %v1764
          %v1766 = vpop.xlane.xlu0 %1765
          %v1767 = vadd.f32 %v1698, %v1699
          %1768 = vadd.xlane.f32.xlu0 %v1767
          %v1769 = vpop.xlane.xlu0 %1768
          %v1770 = vadd.f32 %v1700, %v1701
          %1771 = vadd.xlane.f32.xlu0 %v1770
          %v1772 = vpop.xlane.xlu0 %1771
          %v1773 = vadd.f32 %v1702, %v1703
          %1774 = vadd.xlane.f32.xlu0 %v1773
          %v1775 = vpop.xlane.xlu0 %1774
          %v1776 = vadd.f32 %v1704, %v1705
          %1777 = vadd.xlane.f32.xlu0 %v1776
          %v1778 = vpop.xlane.xlu0 %1777
          %v1779 = vadd.f32 %v1706, %v1707
          %1780 = vadd.xlane.f32.xlu0 %v1779
          %v1781 = vpop.xlane.xlu0 %1780
          %v1782 = vadd.f32 %v1708, %v1709
          %1783 = vadd.xlane.f32.xlu0 %v1782
          %v1784 = vpop.xlane.xlu0 %1783
          %v1785 = vadd.f32 %v1710, %v1711
          %1786 = vadd.xlane.f32.xlu0 %v1785
          %v1787 = vpop.xlane.xlu0 %1786
          %v1788 = vadd.f32 %v1712, %v1713
          %1789 = vadd.xlane.f32.xlu0 %v1788
          %v1790 = vpop.xlane.xlu0 %1789
          %v1791 = vadd.f32 %v1714, %v1715
          %1792 = vadd.xlane.f32.xlu0 %v1791
          %v1793 = vpop.xlane.xlu0 %1792
          %v1794 = vadd.f32 %v1716, %v1717
          %1795 = vadd.xlane.f32.xlu0 %v1794
          %v1796 = vpop.xlane.xlu0 %1795
          %v1797 = vadd.f32 %v1718, %v1719
          %1798 = vadd.xlane.f32.xlu0 %v1797
          %v1799 = vpop.xlane.xlu0 %1798
          %v1800 = vadd.f32 %v1720, %v1721
          %1801 = vadd.xlane.f32.xlu0 %v1800
          %v1802 = vpop.xlane.xlu0 %1801
          %v1803 = vadd.f32 %v1722, %v1723
          %1804 = vadd.xlane.f32.xlu0 %v1803
          %v1805 = vpop.xlane.xlu0 %1804
          %v1806 = vadd.f32 %v1724, %v1725
          %1807 = vadd.xlane.f32.xlu0 %v1806
          %v1808 = vpop.xlane.xlu0 %1807
          %v1809 = vadd.f32 %v1726, %v1727
          %1810 = vadd.xlane.f32.xlu0 %v1809
          %v1811 = vpop.xlane.xlu0 %1810
          %v1812 = vadd.f32 %v1728, %v1729
          %1813 = vadd.xlane.f32.xlu0 %v1812
          %v1814 = vpop.xlane.xlu0 %1813
          %v1815 = vadd.f32 %v1730, %v1731
          %1816 = vadd.xlane.f32.xlu0 %v1815
          %v1817 = vpop.xlane.xlu0 %1816
          %v1818 = vadd.f32 %v1732, %v1733
          %1819 = vadd.xlane.f32.xlu0 %v1818
          %v1820 = vpop.xlane.xlu0 %1819
          %v1821 = vadd.f32 %v1734, %v1735
          %1822 = vadd.xlane.f32.xlu0 %v1821
          %v1823 = vpop.xlane.xlu0 %1822
          %v1824 = vadd.f32 %v1736, %v1737
          %1825 = vadd.xlane.f32.xlu0 %v1824
          %v1826 = vpop.xlane.xlu0 %1825
          %v1827 = vadd.f32 %v1738, %v1739
          %1828 = vadd.xlane.f32.xlu0 %v1827
          %v1829 = vpop.xlane.xlu0 %1828
          %v1830 = vadd.f32 %v1740, %v1741
          %1831 = vadd.xlane.f32.xlu0 %v1830
          %v1832 = vpop.xlane.xlu0 %1831
          %v1833 = vadd.f32 %v1742, %v1743
          %1834 = vadd.xlane.f32.xlu0 %v1833
          %v1835 = vpop.xlane.xlu0 %1834
          %v1836 = vadd.f32 %v1744, %v1745
          %1837 = vadd.xlane.f32.xlu0 %v1836
          %v1838 = vpop.xlane.xlu0 %1837
          %v1839 = vadd.f32 %v1746, %v1747
          %1840 = vadd.xlane.f32.xlu0 %v1839
          %v1841 = vpop.xlane.xlu0 %1840
          %v1842 = vadd.f32 %v1748, %v1749
          %1843 = vadd.xlane.f32.xlu0 %v1842
          %v1844 = vpop.xlane.xlu0 %1843
          %v1845 = vadd.f32 %v1750, %v1751
          %1846 = vadd.xlane.f32.xlu0 %v1845
          %v1847 = vpop.xlane.xlu0 %1846
          %v1848 = vrcp.pop 256.0
          %v1849 = vmul.f32 %v1754, %v1848
          %v1850 = vmul.f32 %v1757, %v1848
          %v1851 = vmul.f32 %v1760, %v1848
          %v1852 = vmul.f32 %v1763, %v1848
          %v1853 = vmul.f32 %v1766, %v1848
          %v1854 = vmul.f32 %v1769, %v1848
          %v1855 = vmul.f32 %v1772, %v1848
          %v1856 = vmul.f32 %v1775, %v1848
          %v1857 = vmul.f32 %v1778, %v1848
          %v1858 = vmul.f32 %v1781, %v1848
          %v1859 = vmul.f32 %v1784, %v1848
          %v1860 = vmul.f32 %v1787, %v1848
          %v1861 = vmul.f32 %v1790, %v1848
          %v1862 = vmul.f32 %v1793, %v1848
          %v1863 = vmul.f32 %v1796, %v1848
          %v1864 = vmul.f32 %v1799, %v1848
          %v1865 = vmul.f32 %v1802, %v1848
          %v1866 = vmul.f32 %v1805, %v1848
          %v1867 = vmul.f32 %v1808, %v1848
          %v1868 = vmul.f32 %v1811, %v1848
          %v1869 = vmul.f32 %v1814, %v1848
          %v1870 = vmul.f32 %v1817, %v1848
          %v1871 = vmul.f32 %v1820, %v1848
          %v1872 = vmul.f32 %v1823, %v1848
          %v1873 = vmul.f32 %v1826, %v1848
          %v1874 = vmul.f32 %v1829, %v1848
          %v1875 = vmul.f32 %v1832, %v1848
          %v1876 = vmul.f32 %v1835, %v1848
          %v1877 = vmul.f32 %v1838, %v1848
          %v1878 = vmul.f32 %v1841, %v1848
          %v1879 = vmul.f32 %v1844, %v1848
          %v1880 = vmul.f32 %v1847, %v1848
          %v1881 = vsub.f32 %v1688, %v1849
          %v1882 = vsub.f32 %v1689, %v1849
          %v1883 = vsub.f32 %v1690, %v1850
          %v1884 = vsub.f32 %v1691, %v1850
          %v1885 = vsub.f32 %v1692, %v1851
          %v1886 = vsub.f32 %v1693, %v1851
          %v1887 = vsub.f32 %v1694, %v1852
          %v1888 = vsub.f32 %v1695, %v1852
          %v1889 = vsub.f32 %v1696, %v1853
          %v1890 = vsub.f32 %v1697, %v1853
          %v1891 = vsub.f32 %v1698, %v1854
          %v1892 = vsub.f32 %v1699, %v1854
          %v1893 = vsub.f32 %v1700, %v1855
          %v1894 = vsub.f32 %v1701, %v1855
          %v1895 = vsub.f32 %v1702, %v1856
          %v1896 = vsub.f32 %v1703, %v1856
          %v1897 = vsub.f32 %v1704, %v1857
          %v1898 = vsub.f32 %v1705, %v1857
          %v1899 = vsub.f32 %v1706, %v1858
          %v1900 = vsub.f32 %v1707, %v1858
          %v1901 = vsub.f32 %v1708, %v1859
          %v1902 = vsub.f32 %v1709, %v1859
          %v1903 = vsub.f32 %v1710, %v1860
          %v1904 = vsub.f32 %v1711, %v1860
          %v1905 = vsub.f32 %v1712, %v1861
          %v1906 = vsub.f32 %v1713, %v1861
          %v1907 = vsub.f32 %v1714, %v1862
          %v1908 = vsub.f32 %v1715, %v1862
          %v1909 = vsub.f32 %v1716, %v1863
          %v1910 = vsub.f32 %v1717, %v1863
          %v1911 = vsub.f32 %v1718, %v1864
          %v1912 = vsub.f32 %v1719, %v1864
          %v1913 = vsub.f32 %v1720, %v1865
          %v1914 = vsub.f32 %v1721, %v1865
          %v1915 = vsub.f32 %v1722, %v1866
          %v1916 = vsub.f32 %v1723, %v1866
          %v1917 = vsub.f32 %v1724, %v1867
          %v1918 = vsub.f32 %v1725, %v1867
          %v1919 = vsub.f32 %v1726, %v1868
          %v1920 = vsub.f32 %v1727, %v1868
          %v1921 = vsub.f32 %v1728, %v1869
          %v1922 = vsub.f32 %v1729, %v1869
          %v1923 = vsub.f32 %v1730, %v1870
          %v1924 = vsub.f32 %v1731, %v1870
          %v1925 = vsub.f32 %v1732, %v1871
          %v1926 = vsub.f32 %v1733, %v1871
          %v1927 = vsub.f32 %v1734, %v1872
          %v1928 = vsub.f32 %v1735, %v1872
          %v1929 = vsub.f32 %v1736, %v1873
          %v1930 = vsub.f32 %v1737, %v1873
          %v1931 = vsub.f32 %v1738, %v1874
          %v1932 = vsub.f32 %v1739, %v1874
          %v1933 = vsub.f32 %v1740, %v1875
          %v1934 = vsub.f32 %v1741, %v1875
          %v1935 = vsub.f32 %v1742, %v1876
          %v1936 = vsub.f32 %v1743, %v1876
          %v1937 = vsub.f32 %v1744, %v1877
          %v1938 = vsub.f32 %v1745, %v1877
          %v1939 = vsub.f32 %v1746, %v1878
          %v1940 = vsub.f32 %v1747, %v1878
          %v1941 = vsub.f32 %v1748, %v1879
          %v1942 = vsub.f32 %v1749, %v1879
          %v1943 = vsub.f32 %v1750, %v1880
          %v1944 = vsub.f32 %v1751, %v1880
          %v1945 = vmul.f32 %v1881, %v1881
          %v1946 = vmul.f32 %v1882, %v1882
          %v1947 = vmul.f32 %v1883, %v1883
          %v1948 = vmul.f32 %v1884, %v1884
          %v1949 = vmul.f32 %v1885, %v1885
          %v1950 = vmul.f32 %v1886, %v1886
          %v1951 = vmul.f32 %v1887, %v1887
          %v1952 = vmul.f32 %v1888, %v1888
          %v1953 = vmul.f32 %v1889, %v1889
          %v1954 = vmul.f32 %v1890, %v1890
          %v1955 = vmul.f32 %v1891, %v1891
          %v1956 = vmul.f32 %v1892, %v1892
          %v1957 = vmul.f32 %v1893, %v1893
          %v1958 = vmul.f32 %v1894, %v1894
          %v1959 = vmul.f32 %v1895, %v1895
          %v1960 = vmul.f32 %v1896, %v1896
          %v1961 = vmul.f32 %v1897, %v1897
          %v1962 = vmul.f32 %v1898, %v1898
          %v1963 = vmul.f32 %v1899, %v1899
          %v1964 = vmul.f32 %v1900, %v1900
          %v1965 = vmul.f32 %v1901, %v1901
          %v1966 = vmul.f32 %v1902, %v1902
          %v1967 = vmul.f32 %v1903, %v1903
          %v1968 = vmul.f32 %v1904, %v1904
          %v1969 = vmul.f32 %v1905, %v1905
          %v1970 = vmul.f32 %v1906, %v1906
          %v1971 = vmul.f32 %v1907, %v1907
          %v1972 = vmul.f32 %v1908, %v1908
          %v1973 = vmul.f32 %v1909, %v1909
          %v1974 = vmul.f32 %v1910, %v1910
          %v1975 = vmul.f32 %v1911, %v1911
          %v1976 = vmul.f32 %v1912, %v1912
          %v1977 = vmul.f32 %v1913, %v1913
          %v1978 = vmul.f32 %v1914, %v1914
          %v1979 = vmul.f32 %v1915, %v1915
          %v1980 = vmul.f32 %v1916, %v1916
          %v1981 = vmul.f32 %v1917, %v1917
          %v1982 = vmul.f32 %v1918, %v1918
          %v1983 = vmul.f32 %v1919, %v1919
          %v1984 = vmul.f32 %v1920, %v1920
          %v1985 = vmul.f32 %v1921, %v1921
          %v1986 = vmul.f32 %v1922, %v1922
          %v1987 = vmul.f32 %v1923, %v1923
          %v1988 = vmul.f32 %v1924, %v1924
          %v1989 = vmul.f32 %v1925, %v1925
          %v1990 = vmul.f32 %v1926, %v1926
          %v1991 = vmul.f32 %v1927, %v1927
          %v1992 = vmul.f32 %v1928, %v1928
          %v1993 = vmul.f32 %v1929, %v1929
          %v1994 = vmul.f32 %v1930, %v1930
          %v1995 = vmul.f32 %v1931, %v1931
          %v1996 = vmul.f32 %v1932, %v1932
          %v1997 = vmul.f32 %v1933, %v1933
          %v1998 = vmul.f32 %v1934, %v1934
          %v1999 = vmul.f32 %v1935, %v1935
          %v2000 = vmul.f32 %v1936, %v1936
          %v2001 = vmul.f32 %v1937, %v1937
          %v2002 = vmul.f32 %v1938, %v1938
          %v2003 = vmul.f32 %v1939, %v1939
          %v2004 = vmul.f32 %v1940, %v1940
          %v2005 = vmul.f32 %v1941, %v1941
          %v2006 = vmul.f32 %v1942, %v1942
          %v2007 = vmul.f32 %v1943, %v1943
          %v2008 = vmul.f32 %v1944, %v1944
          %v2009 = vadd.f32 %v1945, %v1946
          %2010 = vadd.xlane.f32.xlu0 %v2009
          %v2011 = vpop.xlane.xlu0 %2010
          %v2012 = vadd.f32 %v1947, %v1948
          %2013 = vadd.xlane.f32.xlu0 %v2012
          %v2014 = vpop.xlane.xlu0 %2013
          %v2015 = vadd.f32 %v1949, %v1950
          %2016 = vadd.xlane.f32.xlu0 %v2015
          %v2017 = vpop.xlane.xlu0 %2016
          %v2018 = vadd.f32 %v1951, %v1952
          %2019 = vadd.xlane.f32.xlu0 %v2018
          %v2020 = vpop.xlane.xlu0 %2019
          %v2021 = vadd.f32 %v1953, %v1954
          %2022 = vadd.xlane.f32.xlu0 %v2021
          %v2023 = vpop.xlane.xlu0 %2022
          %v2024 = vadd.f32 %v1955, %v1956
          %2025 = vadd.xlane.f32.xlu0 %v2024
          %v2026 = vpop.xlane.xlu0 %2025
          %v2027 = vadd.f32 %v1957, %v1958
          %2028 = vadd.xlane.f32.xlu0 %v2027
          %v2029 = vpop.xlane.xlu0 %2028
          %v2030 = vadd.f32 %v1959, %v1960
          %2031 = vadd.xlane.f32.xlu0 %v2030
          %v2032 = vpop.xlane.xlu0 %2031
          %v2033 = vadd.f32 %v1961, %v1962
          %2034 = vadd.xlane.f32.xlu0 %v2033
          %v2035 = vpop.xlane.xlu0 %2034
          %v2036 = vadd.f32 %v1963, %v1964
          %2037 = vadd.xlane.f32.xlu0 %v2036
          %v2038 = vpop.xlane.xlu0 %2037
          %v2039 = vadd.f32 %v1965, %v1966
          %2040 = vadd.xlane.f32.xlu0 %v2039
          %v2041 = vpop.xlane.xlu0 %2040
          %v2042 = vadd.f32 %v1967, %v1968
          %2043 = vadd.xlane.f32.xlu0 %v2042
          %v2044 = vpop.xlane.xlu0 %2043
          %v2045 = vadd.f32 %v1969, %v1970
          %2046 = vadd.xlane.f32.xlu0 %v2045
          %v2047 = vpop.xlane.xlu0 %2046
          %v2048 = vadd.f32 %v1971, %v1972
          %2049 = vadd.xlane.f32.xlu0 %v2048
          %v2050 = vpop.xlane.xlu0 %2049
          %v2051 = vadd.f32 %v1973, %v1974
          %2052 = vadd.xlane.f32.xlu0 %v2051
          %v2053 = vpop.xlane.xlu0 %2052
          %v2054 = vadd.f32 %v1975, %v1976
          %2055 = vadd.xlane.f32.xlu0 %v2054
          %v2056 = vpop.xlane.xlu0 %2055
          %v2057 = vadd.f32 %v1977, %v1978
          %2058 = vadd.xlane.f32.xlu0 %v2057
          %v2059 = vpop.xlane.xlu0 %2058
          %v2060 = vadd.f32 %v1979, %v1980
          %2061 = vadd.xlane.f32.xlu0 %v2060
          %v2062 = vpop.xlane.xlu0 %2061
          %v2063 = vadd.f32 %v1981, %v1982
          %2064 = vadd.xlane.f32.xlu0 %v2063
          %v2065 = vpop.xlane.xlu0 %2064
          %v2066 = vadd.f32 %v1983, %v1984
          %2067 = vadd.xlane.f32.xlu0 %v2066
          %v2068 = vpop.xlane.xlu0 %2067
          %v2069 = vadd.f32 %v1985, %v1986
          %2070 = vadd.xlane.f32.xlu0 %v2069
          %v2071 = vpop.xlane.xlu0 %2070
          %v2072 = vadd.f32 %v1987, %v1988
          %2073 = vadd.xlane.f32.xlu0 %v2072
          %v2074 = vpop.xlane.xlu0 %2073
          %v2075 = vadd.f32 %v1989, %v1990
          %2076 = vadd.xlane.f32.xlu0 %v2075
          %v2077 = vpop.xlane.xlu0 %2076
          %v2078 = vadd.f32 %v1991, %v1992
          %2079 = vadd.xlane.f32.xlu0 %v2078
          %v2080 = vpop.xlane.xlu0 %2079
          %v2081 = vadd.f32 %v1993, %v1994
          %2082 = vadd.xlane.f32.xlu0 %v2081
          %v2083 = vpop.xlane.xlu0 %2082
          %v2084 = vadd.f32 %v1995, %v1996
          %2085 = vadd.xlane.f32.xlu0 %v2084
          %v2086 = vpop.xlane.xlu0 %2085
          %v2087 = vadd.f32 %v1997, %v1998
          %2088 = vadd.xlane.f32.xlu0 %v2087
          %v2089 = vpop.xlane.xlu0 %2088
          %v2090 = vadd.f32 %v1999, %v2000
          %2091 = vadd.xlane.f32.xlu0 %v2090
          %v2092 = vpop.xlane.xlu0 %2091
          %v2093 = vadd.f32 %v2001, %v2002
          %2094 = vadd.xlane.f32.xlu0 %v2093
          %v2095 = vpop.xlane.xlu0 %2094
          %v2096 = vadd.f32 %v2003, %v2004
          %2097 = vadd.xlane.f32.xlu0 %v2096
          %v2098 = vpop.xlane.xlu0 %2097
          %v2099 = vadd.f32 %v2005, %v2006
          %2100 = vadd.xlane.f32.xlu0 %v2099
          %v2101 = vpop.xlane.xlu0 %2100
          %v2102 = vadd.f32 %v2007, %v2008
          %2103 = vadd.xlane.f32.xlu0 %v2102
          %v2104 = vpop.xlane.xlu0 %2103
          %v2105 = vmul.f32 %v2011, %v1848
          %v2106 = vmul.f32 %v2014, %v1848
          %v2107 = vmul.f32 %v2017, %v1848
          %v2108 = vmul.f32 %v2020, %v1848
          %v2109 = vmul.f32 %v2023, %v1848
          %v2110 = vmul.f32 %v2026, %v1848
          %v2111 = vmul.f32 %v2029, %v1848
          %v2112 = vmul.f32 %v2032, %v1848
          %v2113 = vmul.f32 %v2035, %v1848
          %v2114 = vmul.f32 %v2038, %v1848
          %v2115 = vmul.f32 %v2041, %v1848
          %v2116 = vmul.f32 %v2044, %v1848
          %v2117 = vmul.f32 %v2047, %v1848
          %v2118 = vmul.f32 %v2050, %v1848
          %v2119 = vmul.f32 %v2053, %v1848
          %v2120 = vmul.f32 %v2056, %v1848
          %v2121 = vmul.f32 %v2059, %v1848
          %v2122 = vmul.f32 %v2062, %v1848
          %v2123 = vmul.f32 %v2065, %v1848
          %v2124 = vmul.f32 %v2068, %v1848
          %v2125 = vmul.f32 %v2071, %v1848
          %v2126 = vmul.f32 %v2074, %v1848
          %v2127 = vmul.f32 %v2077, %v1848
          %v2128 = vmul.f32 %v2080, %v1848
          %v2129 = vmul.f32 %v2083, %v1848
          %v2130 = vmul.f32 %v2086, %v1848
          %v2131 = vmul.f32 %v2089, %v1848
          %v2132 = vmul.f32 %v2092, %v1848
          %v2133 = vmul.f32 %v2095, %v1848
          %v2134 = vmul.f32 %v2098, %v1848
          %v2135 = vmul.f32 %v2101, %v1848
          %v2136 = vmul.f32 %v2104, %v1848
          %v2137 = vadd.f32 %v2105, 1e-12
          %v2138 = vadd.f32 %v2106, 1e-12
          %v2139 = vadd.f32 %v2107, 1e-12
          %v2140 = vadd.f32 %v2108, 1e-12
          %v2141 = vadd.f32 %v2109, 1e-12
          %v2142 = vadd.f32 %v2110, 1e-12
          %v2143 = vadd.f32 %v2111, 1e-12
          %v2144 = vadd.f32 %v2112, 1e-12
          %v2145 = vadd.f32 %v2113, 1e-12
          %v2146 = vadd.f32 %v2114, 1e-12
          %v2147 = vadd.f32 %v2115, 1e-12
          %v2148 = vadd.f32 %v2116, 1e-12
          %v2149 = vadd.f32 %v2117, 1e-12
          %v2150 = vadd.f32 %v2118, 1e-12
          %v2151 = vadd.f32 %v2119, 1e-12
          %v2152 = vadd.f32 %v2120, 1e-12
          %v2153 = vadd.f32 %v2121, 1e-12
          %v2154 = vadd.f32 %v2122, 1e-12
          %v2155 = vadd.f32 %v2123, 1e-12
          %v2156 = vadd.f32 %v2124, 1e-12
          %v2157 = vadd.f32 %v2125, 1e-12
          %v2158 = vadd.f32 %v2126, 1e-12
          %v2159 = vadd.f32 %v2127, 1e-12
          %v2160 = vadd.f32 %v2128, 1e-12
          %v2161 = vadd.f32 %v2129, 1e-12
          %v2162 = vadd.f32 %v2130, 1e-12
          %v2163 = vadd.f32 %v2131, 1e-12
          %v2164 = vadd.f32 %v2132, 1e-12
          %v2165 = vadd.f32 %v2133, 1e-12
          %v2166 = vadd.f32 %v2134, 1e-12
          %v2167 = vadd.f32 %v2135, 1e-12
          %v2168 = vadd.f32 %v2136, 1e-12
          %v2169 = vrsqrt.pop %v2137
          %v2170 = vrsqrt.pop %v2138
          %v2171 = vrsqrt.pop %v2139
          %v2172 = vrsqrt.pop %v2140
          %v2173 = vrsqrt.pop %v2141
          %v2174 = vrsqrt.pop %v2142
          %v2175 = vrsqrt.pop %v2143
          %v2176 = vrsqrt.pop %v2144
          %v2177 = vrsqrt.pop %v2145
          %v2178 = vrsqrt.pop %v2146
          %v2179 = vrsqrt.pop %v2147
          %v2180 = vrsqrt.pop %v2148
          %v2181 = vrsqrt.pop %v2149
          %v2182 = vrsqrt.pop %v2150
          %v2183 = vrsqrt.pop %v2151
          %v2184 = vrsqrt.pop %v2152
          %v2185 = vrsqrt.pop %v2153
          %v2186 = vrsqrt.pop %v2154
          %v2187 = vrsqrt.pop %v2155
          %v2188 = vrsqrt.pop %v2156
          %v2189 = vrsqrt.pop %v2157
          %v2190 = vrsqrt.pop %v2158
          %v2191 = vrsqrt.pop %v2159
          %v2192 = vrsqrt.pop %v2160
          %v2193 = vrsqrt.pop %v2161
          %v2194 = vrsqrt.pop %v2162
          %v2195 = vrsqrt.pop %v2163
          %v2196 = vrsqrt.pop %v2164
          %v2197 = vrsqrt.pop %v2165
          %v2198 = vrsqrt.pop %v2166
          %v2199 = vrsqrt.pop %v2167
          %v2200 = vrsqrt.pop %v2168
          %v2201 = vmul.f32 %v1881, %v2169
          %v2202 = vmul.f32 %v1882, %v2169
          %v2203 = vmul.f32 %v1883, %v2170
          %v2204 = vmul.f32 %v1884, %v2170
          %v2205 = vmul.f32 %v1885, %v2171
          %v2206 = vmul.f32 %v1886, %v2171
          %v2207 = vmul.f32 %v1887, %v2172
          %v2208 = vmul.f32 %v1888, %v2172
          %v2209 = vmul.f32 %v1889, %v2173
          %v2210 = vmul.f32 %v1890, %v2173
          %v2211 = vmul.f32 %v1891, %v2174
          %v2212 = vmul.f32 %v1892, %v2174
          %v2213 = vmul.f32 %v1893, %v2175
          %v2214 = vmul.f32 %v1894, %v2175
          %v2215 = vmul.f32 %v1895, %v2176
          %v2216 = vmul.f32 %v1896, %v2176
          %v2217 = vmul.f32 %v1897, %v2177
          %v2218 = vmul.f32 %v1898, %v2177
          %v2219 = vmul.f32 %v1899, %v2178
          %v2220 = vmul.f32 %v1900, %v2178
          %v2221 = vmul.f32 %v1901, %v2179
          %v2222 = vmul.f32 %v1902, %v2179
          %v2223 = vmul.f32 %v1903, %v2180
          %v2224 = vmul.f32 %v1904, %v2180
          %v2225 = vmul.f32 %v1905, %v2181
          %v2226 = vmul.f32 %v1906, %v2181
          %v2227 = vmul.f32 %v1907, %v2182
          %v2228 = vmul.f32 %v1908, %v2182
          %v2229 = vmul.f32 %v1909, %v2183
          %v2230 = vmul.f32 %v1910, %v2183
          %v2231 = vmul.f32 %v1911, %v2184
          %v2232 = vmul.f32 %v1912, %v2184
          %v2233 = vmul.f32 %v1913, %v2185
          %v2234 = vmul.f32 %v1914, %v2185
          %v2235 = vmul.f32 %v1915, %v2186
          %v2236 = vmul.f32 %v1916, %v2186
          %v2237 = vmul.f32 %v1917, %v2187
          %v2238 = vmul.f32 %v1918, %v2187
          %v2239 = vmul.f32 %v1919, %v2188
          %v2240 = vmul.f32 %v1920, %v2188
          %v2241 = vmul.f32 %v1921, %v2189
          %v2242 = vmul.f32 %v1922, %v2189
          %v2243 = vmul.f32 %v1923, %v2190
          %v2244 = vmul.f32 %v1924, %v2190
          %v2245 = vmul.f32 %v1925, %v2191
          %v2246 = vmul.f32 %v1926, %v2191
          %v2247 = vmul.f32 %v1927, %v2192
          %v2248 = vmul.f32 %v1928, %v2192
          %v2249 = vmul.f32 %v1929, %v2193
          %v2250 = vmul.f32 %v1930, %v2193
          %v2251 = vmul.f32 %v1931, %v2194
          %v2252 = vmul.f32 %v1932, %v2194
          %v2253 = vmul.f32 %v1933, %v2195
          %v2254 = vmul.f32 %v1934, %v2195
          %v2255 = vmul.f32 %v1935, %v2196
          %v2256 = vmul.f32 %v1936, %v2196
          %v2257 = vmul.f32 %v1937, %v2197
          %v2258 = vmul.f32 %v1938, %v2197
          %v2259 = vmul.f32 %v1939, %v2198
          %v2260 = vmul.f32 %v1940, %v2198
          %v2261 = vmul.f32 %v1941, %v2199
          %v2262 = vmul.f32 %v1942, %v2199
          %v2263 = vmul.f32 %v1943, %v2200
          %v2264 = vmul.f32 %v1944, %v2200
          %v2265 = vld [vmem:[#allocation11] sm:$0x3]
          %v2267 = vlaneseq
          %v2268 = vshrl.u32 %v2267, 7
          %v2269 = vsub.s32 0, %v2268
          %v2270 = vrot.slane %v2265, %v2269
          %v2271 = vlaneseq
          %v2272 = vshrl.u32 %v2271, 7
          %v2273 = vsub.s32 1, %v2272
          %v2274 = vrot.slane %v2265, %v2273
          %v2277 = vmul.f32 %v2201, %v2270
          %v2278 = vmul.f32 %v2202, %v2274
          %v2279 = vmul.f32 %v2203, %v2270
          %v2280 = vmul.f32 %v2204, %v2274
          %v2281 = vmul.f32 %v2205, %v2270
          %v2282 = vmul.f32 %v2206, %v2274
          %v2283 = vmul.f32 %v2207, %v2270
          %v2284 = vmul.f32 %v2208, %v2274
          %v2285 = vmul.f32 %v2209, %v2270
          %v2286 = vmul.f32 %v2210, %v2274
          %v2287 = vmul.f32 %v2211, %v2270
          %v2288 = vmul.f32 %v2212, %v2274
          %v2289 = vmul.f32 %v2213, %v2270
          %v2290 = vmul.f32 %v2214, %v2274
          %v2291 = vmul.f32 %v2215, %v2270
          %v2292 = vmul.f32 %v2216, %v2274
          %v2293 = vmul.f32 %v2217, %v2270
          %v2294 = vmul.f32 %v2218, %v2274
          %v2295 = vmul.f32 %v2219, %v2270
          %v2296 = vmul.f32 %v2220, %v2274
          %v2297 = vmul.f32 %v2221, %v2270
          %v2298 = vmul.f32 %v2222, %v2274
          %v2299 = vmul.f32 %v2223, %v2270
          %v2300 = vmul.f32 %v2224, %v2274
          %v2301 = vmul.f32 %v2225, %v2270
          %v2302 = vmul.f32 %v2226, %v2274
          %v2303 = vmul.f32 %v2227, %v2270
          %v2304 = vmul.f32 %v2228, %v2274
          %v2305 = vmul.f32 %v2229, %v2270
          %v2306 = vmul.f32 %v2230, %v2274
          %v2307 = vmul.f32 %v2231, %v2270
          %v2308 = vmul.f32 %v2232, %v2274
          %v2309 = vmul.f32 %v2233, %v2270
          %v2310 = vmul.f32 %v2234, %v2274
          %v2311 = vmul.f32 %v2235, %v2270
          %v2312 = vmul.f32 %v2236, %v2274
          %v2313 = vmul.f32 %v2237, %v2270
          %v2314 = vmul.f32 %v2238, %v2274
          %v2315 = vmul.f32 %v2239, %v2270
          %v2316 = vmul.f32 %v2240, %v2274
          %v2317 = vmul.f32 %v2241, %v2270
          %v2318 = vmul.f32 %v2242, %v2274
          %v2319 = vmul.f32 %v2243, %v2270
          %v2320 = vmul.f32 %v2244, %v2274
          %v2321 = vmul.f32 %v2245, %v2270
          %v2322 = vmul.f32 %v2246, %v2274
          %v2323 = vmul.f32 %v2247, %v2270
          %v2324 = vmul.f32 %v2248, %v2274
          %v2325 = vmul.f32 %v2249, %v2270
          %v2326 = vmul.f32 %v2250, %v2274
          %v2327 = vmul.f32 %v2251, %v2270
          %v2328 = vmul.f32 %v2252, %v2274
          %v2329 = vmul.f32 %v2253, %v2270
          %v2330 = vmul.f32 %v2254, %v2274
          %v2331 = vmul.f32 %v2255, %v2270
          %v2332 = vmul.f32 %v2256, %v2274
          %v2333 = vmul.f32 %v2257, %v2270
          %v2334 = vmul.f32 %v2258, %v2274
          %v2335 = vmul.f32 %v2259, %v2270
          %v2336 = vmul.f32 %v2260, %v2274
          %v2337 = vmul.f32 %v2261, %v2270
          %v2338 = vmul.f32 %v2262, %v2274
          %v2339 = vmul.f32 %v2263, %v2270
          %v2340 = vmul.f32 %v2264, %v2274
          %v2341 = vld [vmem:[#allocation12] sm:$0x3]
          %v2343 = vlaneseq
          %v2344 = vshrl.u32 %v2343, 7
          %v2345 = vsub.s32 0, %v2344
          %v2346 = vrot.slane %v2341, %v2345
          %v2347 = vlaneseq
          %v2348 = vshrl.u32 %v2347, 7
          %v2349 = vsub.s32 1, %v2348
          %v2350 = vrot.slane %v2341, %v2349
          %v2353 = vadd.f32 %v2277, %v2346
          %v2354 = vadd.f32 %v2278, %v2350
          %v2355 = vadd.f32 %v2279, %v2346
          %v2356 = vadd.f32 %v2280, %v2350
          %v2357 = vadd.f32 %v2281, %v2346
          %v2358 = vadd.f32 %v2282, %v2350
          %v2359 = vadd.f32 %v2283, %v2346
          %v2360 = vadd.f32 %v2284, %v2350
          %v2361 = vadd.f32 %v2285, %v2346
          %v2362 = vadd.f32 %v2286, %v2350
          %v2363 = vadd.f32 %v2287, %v2346
          %v2364 = vadd.f32 %v2288, %v2350
          %v2365 = vadd.f32 %v2289, %v2346
          %v2366 = vadd.f32 %v2290, %v2350
          %v2367 = vadd.f32 %v2291, %v2346
          %v2368 = vadd.f32 %v2292, %v2350
          %v2369 = vadd.f32 %v2293, %v2346
          %v2370 = vadd.f32 %v2294, %v2350
          %v2371 = vadd.f32 %v2295, %v2346
          %v2372 = vadd.f32 %v2296, %v2350
          %v2373 = vadd.f32 %v2297, %v2346
          %v2374 = vadd.f32 %v2298, %v2350
          %v2375 = vadd.f32 %v2299, %v2346
          %v2376 = vadd.f32 %v2300, %v2350
          %v2377 = vadd.f32 %v2301, %v2346
          %v2378 = vadd.f32 %v2302, %v2350
          %v2379 = vadd.f32 %v2303, %v2346
          %v2380 = vadd.f32 %v2304, %v2350
          %v2381 = vadd.f32 %v2305, %v2346
          %v2382 = vadd.f32 %v2306, %v2350
          %v2383 = vadd.f32 %v2307, %v2346
          %v2384 = vadd.f32 %v2308, %v2350
          %v2385 = vadd.f32 %v2309, %v2346
          %v2386 = vadd.f32 %v2310, %v2350
          %v2387 = vadd.f32 %v2311, %v2346
          %v2388 = vadd.f32 %v2312, %v2350
          %v2389 = vadd.f32 %v2313, %v2346
          %v2390 = vadd.f32 %v2314, %v2350
          %v2391 = vadd.f32 %v2315, %v2346
          %v2392 = vadd.f32 %v2316, %v2350
          %v2393 = vadd.f32 %v2317, %v2346
          %v2394 = vadd.f32 %v2318, %v2350
          %v2395 = vadd.f32 %v2319, %v2346
          %v2396 = vadd.f32 %v2320, %v2350
          %v2397 = vadd.f32 %v2321, %v2346
          %v2398 = vadd.f32 %v2322, %v2350
          %v2399 = vadd.f32 %v2323, %v2346
          %v2400 = vadd.f32 %v2324, %v2350
          %v2401 = vadd.f32 %v2325, %v2346
          %v2402 = vadd.f32 %v2326, %v2350
          %v2403 = vadd.f32 %v2327, %v2346
          %v2404 = vadd.f32 %v2328, %v2350
          %v2405 = vadd.f32 %v2329, %v2346
          %v2406 = vadd.f32 %v2330, %v2350
          %v2407 = vadd.f32 %v2331, %v2346
          %v2408 = vadd.f32 %v2332, %v2350
          %v2409 = vadd.f32 %v2333, %v2346
          %v2410 = vadd.f32 %v2334, %v2350
          %v2411 = vadd.f32 %v2335, %v2346
          %v2412 = vadd.f32 %v2336, %v2350
          %v2413 = vadd.f32 %v2337, %v2346
          %v2414 = vadd.f32 %v2338, %v2350
          %v2415 = vadd.f32 %v2339, %v2346
          %v2416 = vadd.f32 %v2340, %v2350
          %2417 = vst [vmem:[%s444] sm:$0xff] %v2353
          %2418 = vst [vmem:[%s444 + $0x8] sm:$0xff] %v2354
          %2419 = vst [vmem:[%s444 + $0x10] sm:$0xff] %v2355
          %2420 = vst [vmem:[%s444 + $0x18] sm:$0xff] %v2356
          %2421 = vst [vmem:[%s444 + $0x20] sm:$0xff] %v2357
          %2422 = vst [vmem:[%s444 + $0x28] sm:$0xff] %v2358
          %2423 = vst [vmem:[%s444 + $0x30] sm:$0xff] %v2359
          %2424 = vst [vmem:[%s444 + $0x38] sm:$0xff] %v2360
          %2425 = vst [vmem:[%s444 + $0x40] sm:$0xff] %v2361
          %2426 = vst [vmem:[%s444 + $0x48] sm:$0xff] %v2362
          %2427 = vst [vmem:[%s444 + $0x50] sm:$0xff] %v2363
          %2428 = vst [vmem:[%s444 + $0x58] sm:$0xff] %v2364
          %2429 = vst [vmem:[%s444 + $0x60] sm:$0xff] %v2365
          %2430 = vst [vmem:[%s444 + $0x68] sm:$0xff] %v2366
          %2431 = vst [vmem:[%s444 + $0x70] sm:$0xff] %v2367
          %2432 = vst [vmem:[%s444 + $0x78] sm:$0xff] %v2368
          %2433 = vst [vmem:[%s444 + $0x80] sm:$0xff] %v2369
          %2434 = vst [vmem:[%s444 + $0x88] sm:$0xff] %v2370
          %2435 = vst [vmem:[%s444 + $0x90] sm:$0xff] %v2371
          %2436 = vst [vmem:[%s444 + $0x98] sm:$0xff] %v2372
          %2437 = vst [vmem:[%s444 + $0xa0] sm:$0xff] %v2373
          %2438 = vst [vmem:[%s444 + $0xa8] sm:$0xff] %v2374
          %2439 = vst [vmem:[%s444 + $0xb0] sm:$0xff] %v2375
          %2440 = vst [vmem:[%s444 + $0xb8] sm:$0xff] %v2376
          %2441 = vst [vmem:[%s444 + $0xc0] sm:$0xff] %v2377
          %2442 = vst [vmem:[%s444 + $0xc8] sm:$0xff] %v2378
          %2443 = vst [vmem:[%s444 + $0xd0] sm:$0xff] %v2379
          %2444 = vst [vmem:[%s444 + $0xd8] sm:$0xff] %v2380
          %2445 = vst [vmem:[%s444 + $0xe0] sm:$0xff] %v2381
          %2446 = vst [vmem:[%s444 + $0xe8] sm:$0xff] %v2382
          %2447 = vst [vmem:[%s444 + $0xf0] sm:$0xff] %v2383
          %2448 = vst [vmem:[%s444 + $0xf8] sm:$0xff] %v2384
          %2449 = vst [vmem:[%s444 + $0x100] sm:$0xff] %v2385
          %2450 = vst [vmem:[%s444 + $0x108] sm:$0xff] %v2386
          %2451 = vst [vmem:[%s444 + $0x110] sm:$0xff] %v2387
          %2452 = vst [vmem:[%s444 + $0x118] sm:$0xff] %v2388
          %2453 = vst [vmem:[%s444 + $0x120] sm:$0xff] %v2389
          %2454 = vst [vmem:[%s444 + $0x128] sm:$0xff] %v2390
          %2455 = vst [vmem:[%s444 + $0x130] sm:$0xff] %v2391
          %2456 = vst [vmem:[%s444 + $0x138] sm:$0xff] %v2392
          %2457 = vst [vmem:[%s444 + $0x140] sm:$0xff] %v2393
          %2458 = vst [vmem:[%s444 + $0x148] sm:$0xff] %v2394
          %2459 = vst [vmem:[%s444 + $0x150] sm:$0xff] %v2395
          %2460 = vst [vmem:[%s444 + $0x158] sm:$0xff] %v2396
          %2461 = vst [vmem:[%s444 + $0x160] sm:$0xff] %v2397
          %2462 = vst [vmem:[%s444 + $0x168] sm:$0xff] %v2398
          %2463 = vst [vmem:[%s444 + $0x170] sm:$0xff] %v2399
          %2464 = vst [vmem:[%s444 + $0x178] sm:$0xff] %v2400
          %2465 = vst [vmem:[%s444 + $0x180] sm:$0xff] %v2401
          %2466 = vst [vmem:[%s444 + $0x188] sm:$0xff] %v2402
          %2467 = vst [vmem:[%s444 + $0x190] sm:$0xff] %v2403
          %2468 = vst [vmem:[%s444 + $0x198] sm:$0xff] %v2404
          %2469 = vst [vmem:[%s444 + $0x1a0] sm:$0xff] %v2405
          %2470 = vst [vmem:[%s444 + $0x1a8] sm:$0xff] %v2406
          %2471 = vst [vmem:[%s444 + $0x1b0] sm:$0xff] %v2407
          %2472 = vst [vmem:[%s444 + $0x1b8] sm:$0xff] %v2408
          %2473 = vst [vmem:[%s444 + $0x1c0] sm:$0xff] %v2409
          %2474 = vst [vmem:[%s444 + $0x1c8] sm:$0xff] %v2410
          %2475 = vst [vmem:[%s444 + $0x1d0] sm:$0xff] %v2411
          %2476 = vst [vmem:[%s444 + $0x1d8] sm:$0xff] %v2412
          %2477 = vst [vmem:[%s444 + $0x1e0] sm:$0xff] %v2413
          %2478 = vst [vmem:[%s444 + $0x1e8] sm:$0xff] %v2414
          %2479 = vst [vmem:[%s444 + $0x1f0] sm:$0xff] %v2415
          %2480 = vst [vmem:[%s444 + $0x1f8] sm:$0xff] %v2416
        $region84: #{tpu_custom_call.1} parent=47 // pred_fallthru
          _
        %s2481 = sand.u32 %s215, 1
        %s2482 = scalar_lea.sflag [#allocation5], %s2481
        %s2483 = sand.u32 %s215, 1
        %s2484 = smul.addr %s2483, 512
        %s2485 = scalar_lea.vmem [#allocation15], %s2484
        // Predicated region
        $region85: #{tpu_custom_call.1} parent=47 // pred_check
          %p2486 = pneg %p225
        $region86: #{tpu_custom_call.1} parent=47 // pred_check_branch
          %2488 = sbr.rel (%p2486) target = $region88
        $region87: #{tpu_custom_call.1} parent=47 // pred_region
          %s2489 = smul.u32 32, %s35
          %s2491 = ssub.s32 8192, 8192
          %2492 = vsyncadd %s2482, %s2491
          %s2493 = smul.addr %s2489, 2
          %s2494 = smul.addr %s2493, 128
          %s2495 = scalar_lea.hbm %s7, %s2494
          %s2496 = sshll.u32 %s2485, 4
          %s2497 = int_to_ptr.vmem [resolvable:$true] %s2496
          %2502 = dma.vmem_to_hbm [thread:$0]  %s2497, 8192, %s2495, %s2482, 256, 256, 16
        $region88: #{tpu_custom_call.1} parent=47 // pred_fallthru
          _
      $region48: #{tpu_custom_call.1} parent=5 // pred_fallthru
        _
      %p2503 = scmp.le.s32.totalorder 2, %s26
      // Predicated region
      $region89: #{tpu_custom_call.1} parent=5 // pred_check
        %p2504 = pneg %p2503
      $region90: #{tpu_custom_call.1} parent=5 // pred_check_branch
        %2506 = sbr.rel (%p2504) target = $region92
      $region91: #{tpu_custom_call.1} parent=5 // pred_region
        %s2507 = ssub.s32 %s26, 2
        // Predicated region
        $region93: #{tpu_custom_call.1} parent=91 // pred_check
          %p2508 = pneg %p231
        $region94: #{tpu_custom_call.1} parent=91 // pred_check_branch
          %2510 = sbr.rel (%p2508) target = $region96
        $region95: #{tpu_custom_call.1} parent=91 // pred_region
          %s2511 = sand.u32 %s216, 1
          %s2512 = scalar_lea.sflag [#allocation5], %s2511
          %s2513 = sand.u32 %s216, 1
          %s2514 = smul.addr %s2513, 512
          %s2515 = scalar_lea.vmem [#allocation15], %s2514
          %2516 = dma.done %s2512, 8192
        $region96: #{tpu_custom_call.1} parent=91 // pred_fallthru
          _
      $region92: #{tpu_custom_call.1} parent=5 // pred_fallthru
        _
    $region6: #{tpu_custom_call.1} parent=1 // loop_footer
      %s30 = sadd.s32 1, %s26
    $region7: #{tpu_custom_call.1} parent=1 // loop_footer_branch
      %25 = sbr.rel target = $region3
    $region8: #{tpu_custom_call.1} parent=1 // loop_exit
      _
    %2517 = vsyncpa [#allocation4], 1
    %s2518 = scalar_lea.sflag [#allocation4], 1
    %2519 = vsyncpa %s2518, 1
    %2520 = vsyncpa [#allocation7], 1
    %s2521 = scalar_lea.sflag [#allocation7], 1
    %2522 = vsyncpa %s2521, 1
    %2523 = vsyncpa [#allocation10], 1
    %s2524 = scalar_lea.sflag [#allocation10], 1
    %2525 = vsyncpa %s2524, 1
    %2526 = vsyncpa [#allocation13], 1
    %2527 = vsyncpa [#allocation5], 1
    %s2528 = scalar_lea.sflag [#allocation5], 1
    %2529 = vsyncpa %s2528, 1

</llo_original>
